<compile_context>
chip_gen: v6e
topology: v6e:2x2x1
jax: 0.10.0
libtpu: 0.0.40
codegen_flags: <defaults>
</compile_context>

<pallas_src>
import functools
import math

import jax
import jax.numpy as jnp
from jax import lax
from jax.experimental import pallas as pl
from jax.experimental.pallas import tpu as pltpu


def _layer_norm(x, w, b, eps=1e-5):
    mu = jnp.mean(x, axis=-1, keepdims=True)
    var = jnp.mean(jnp.square(x - mu), axis=-1, keepdims=True)
    return (x - mu) * lax.rsqrt(var + eps) * w + b


def _gelu_exact(x):
    # nn.GELU() default is the exact erf-based GELU.  (The tanh approximation would
    # move this to the EUP slot but deviates numerically from the reference.)
    return 0.5 * x * (1.0 + lax.erf(x * (1.0 / math.sqrt(2.0))))


def gpt_blocks_kernel(n_head, T1, layer_axis,
                      x_in, ln1w, ln1b, qkvw, qkvb, apw, apb,
                      ln2w, ln2b, fcw, fcb, mpw, mpb, lnfw, lnfb,
                      x_out, att_sc):
    l = pl.program_id(layer_axis)
    n_layer = pl.num_programs(layer_axis)

    M, C = x_out.shape              # M = (batch rows in this block) * T1
    nB = M // T1
    Dh = C // n_head
    scale = 1.0 / math.sqrt(Dh)
    bf16 = jnp.bfloat16

    # The x_out VMEM block IS the carried activation (resident across the layer
    # axis); initialize it once from x_in with a single bulk copy.
    @pl.when(l == 0)
    def _():
        x_out[...] = x_in[...]

    # Per-layer weights: big matrices already bf16 in HBM, biases / LN params f32.
    w_qkv = qkvw[0]            # (C, 3C)  bf16
    b_qkv = qkvb[0]            # (1, 3C)  f32
    w_ap = apw[0]              # (C, C)   bf16
    b_ap = apb[0]              # (1, C)   f32
    w_fc = fcw[0]              # (C, 4C)  bf16
    b_fc = fcb[0]              # (1, 4C)  f32
    w_mp = mpw[0]              # (4C, C)  bf16
    b_mp = mpb[0]              # (1, C)   f32
    w1, b1 = ln1w[0], ln1b[0]
    w2, b2 = ln2w[0], ln2b[0]
    wf, bfin = lnfw[...], lnfb[...]

    # Causal mask computed once per grid step (shared across batch/head loops).
    row = lax.broadcasted_iota(jnp.int32, (T1, T1), 0)
    col = lax.broadcasted_iota(jnp.int32, (T1, T1), 1)
    causal = col <= row

    x = x_out[...]                                            # (M, C) f32 carry

    # ---- causal self-attention ----
    h = _layer_norm(x, w1, b1)
    qkv = jnp.dot(h.astype(bf16), w_qkv,
                  preferred_element_type=jnp.float32) + b_qkv     # (M, 3C) f32

    # TODO(synk): for Dh < 128, process ceil(128/Dh) heads per score matmul with a
    # block-diagonal mask (or pad Dh to 128) to keep the MXU contraction 128-lane
    # aligned; kept strictly per-head here for clarity/correctness at small Dh.
    for bi in range(nB):
        base = bi * T1
        qb = qkv[base:base + T1, 0:C]
        kb = qkv[base:base + T1, C:2 * C]
        vb = qkv[base:base + T1, 2 * C:3 * C]
        for hd in range(n_head):
            cs = slice(hd * Dh, (hd + 1) * Dh)
            # MXU is bf16-native: bf16 operands for q.kT and p.v, softmax in f32.
            q = qb[:, cs].astype(bf16)
            k = kb[:, cs].astype(bf16)
            v = vb[:, cs].astype(bf16)
            s = lax.dot_general(q, k, (((1,), (1,)), ((), ())),
                                preferred_element_type=jnp.float32) * scale
            s = jnp.where(causal, s, -1e30)
            m = jnp.max(s, axis=-1, keepdims=True)
            p = jnp.exp(s - m)
            p = p * pl.reciprocal(jnp.sum(p, axis=-1, keepdims=True), approx=True)
            ctx = jnp.dot(p.astype(bf16), v, preferred_element_type=jnp.float32)
            # Write each head's context directly into the preallocated (M, C)
            # attention buffer (no heads/rows lists, no jnp.concatenate copies).
            att_sc[base:base + T1, cs] = ctx.astype(bf16)

    # Single C-wide output projection for all heads / batch rows.
    y = jnp.dot(att_sc[...], w_ap, preferred_element_type=jnp.float32) + b_ap
    x = x + y

    # ---- MLP: hidden dim in chunks, GELU fused per chunk so the (M, 4C) f32
    # intermediate never fully materializes (bounds VMEM on v7x for large C) ----
    H4 = w_fc.shape[-1]
    tkh = 1024 if (H4 > 1024 and H4 % 1024 == 0) else H4
    h2 = _layer_norm(x, w2, b2).astype(bf16)
    acc = None
    for ci in range(H4 // tkh):
        hs = slice(ci * tkh, (ci + 1) * tkh)
        hc = jnp.dot(h2, w_fc[:, hs],
                     preferred_element_type=jnp.float32) + b_fc[:, hs]
        hc = _gelu_exact(hc)
        part = jnp.dot(hc.astype(bf16), w_mp[hs, :],
                       preferred_element_type=jnp.float32)
        acc = part if acc is None else acc + part
    x = x + acc + b_mp

    # Carry for the next layer, or ln_f in place on the last layer (single cold
    # final HBM writeback happens automatically when the grid finishes).
    @pl.when(l < n_layer - 1)
    def _():
        x_out[...] = x

    @pl.when(l == n_layer - 1)
    def _():
        x_out[...] = _layer_norm(x, wf, bfin)


def _vmem_limit_bytes():
    # Derive the scoped-VMEM limit from the actual chip (v7x has only 64 MiB).
    cap = 64 * 1024 * 1024
    try:
        cap = int(getattr(pltpu.get_tpu_info(), 'vmem_capacity_bytes', cap))
    except Exception:
        pass
    return max(32 * 1024 * 1024, min(cap - 8 * 1024 * 1024, 100 * 1024 * 1024))


def run_blocks(x0, params, batch_parallel=False):
    """All transformer blocks + ln_f.  x0: (B, T1, C) f32 with T1 % 8 == 0.

    batch_parallel=True adds a leading 'parallel' grid axis over the batch so a
    multi-TensorCore chip (v7x) shards compute-bound prefill across cores; keep it
    False in the weight-streaming-bound (small-M / decode) regime, where it would
    duplicate per-layer weight DMA.
    """
    B, T1, C = x0.shape
    L = params['ln1_w'].shape[0]
    M = B * T1
    x2d = x0.reshape(M, C)
    C3, C4 = 3 * C, 4 * C

    if batch_parallel and B > 1:
        grid = (B, L)
        sem = ("parallel", "arbitrary")
        xmap = lambda b, l: (b, 0)
        wmap = lambda b, l: (l, 0, 0)
        fmap = lambda b, l: (0, 0)
        m_blk = T1
    else:
        grid = (L,)
        sem = ("arbitrary",)
        xmap = lambda l: (0, 0)
        wmap = lambda l: (l, 0, 0)
        fmap = lambda l: (0, 0)
        m_blk = M

    grid_spec = pltpu.PrefetchScalarGridSpec(
        num_scalar_prefetch=0,
        grid=grid,
        in_specs=[
            pl.BlockSpec((m_blk, C), xmap),            # x_in (aliased to out)
            pl.BlockSpec((1, 1, C), wmap),             # ln1_w
            pl.BlockSpec((1, 1, C), wmap),             # ln1_b
            pl.BlockSpec((1, C, C3), wmap),            # qkv_w   (bf16)
            pl.BlockSpec((1, 1, C3), wmap),            # qkv_b
            pl.BlockSpec((1, C, C), wmap),             # aproj_w (bf16)
            pl.BlockSpec((1, 1, C), wmap),             # aproj_b
            pl.BlockSpec((1, 1, C), wmap),             # ln2_w
            pl.BlockSpec((1, 1, C), wmap),             # ln2_b
            pl.BlockSpec((1, C, C4), wmap),            # fc_w    (bf16)
            pl.BlockSpec((1, 1, C4), wmap),            # fc_b
            pl.BlockSpec((1, C4, C), wmap),            # mproj_w (bf16)
            pl.BlockSpec((1, 1, C), wmap),             # mproj_b
            pl.BlockSpec((1, C), fmap),                # lnf_w
            pl.BlockSpec((1, C), fmap),                # lnf_b
        ],
        out_specs=pl.BlockSpec((m_blk, C), xmap),
        # Only remaining scratch: bf16 per-head attention output buffer.
        scratch_shapes=[pltpu.VMEM((m_blk, C), jnp.bfloat16)],
    )
    kernel = functools.partial(gpt_blocks_kernel, params['n_head'], T1,
                               len(grid) - 1)
    out2d = pl.pallas_call(
        kernel,
        out_shape=jax.ShapeDtypeStruct((M, C), jnp.float32),
        grid_spec=grid_spec,
        input_output_aliases={0: 0},
        compiler_params=pltpu.CompilerParams(
            dimension_semantics=sem,
            vmem_limit_bytes=_vmem_limit_bytes()),
    )(x2d,
      params['ln1_w'], params['ln1_b'],
      params['qkv_w'], params['qkv_b'],
      params['aproj_w'], params['aproj_b'],
      params['ln2_w'], params['ln2_b'],
      params['fc_w'], params['fc_b'],
      params['mproj_w'], params['mproj_b'],
      params['lnf_w'], params['lnf_b'])
    return out2d.reshape(B, T1, C)


def lm_head_kernel(x_ref, w_ref, o_ref):
    # logits tile = x_last (B, C) contracted against the tied embedding (tv, C) on C.
    o_ref[...] = lax.dot_general(x_ref[...].astype(jnp.bfloat16), w_ref[...],
                                 (((1,), (1,)), ((), ())),
                                 preferred_element_type=jnp.float32)


def lm_head(x_last, wte_lm, tile_v=2048):
    B, C = x_last.shape
    Vp = wte_lm.shape[0]                 # vocab padded to a lane-dense multiple
    tv = min(tile_v, Vp)
    assert Vp % tv == 0
    return pl.pallas_call(
        lm_head_kernel,
        out_shape=jax.ShapeDtypeStruct((B, Vp), jnp.float32),
        grid_spec=pltpu.PrefetchScalarGridSpec(
            num_scalar_prefetch=0,
            grid=(Vp // tv,),
            in_specs=[pl.BlockSpec((B, C), lambda j: (0, 0)),
                      pl.BlockSpec((tv, C), lambda j: (j, 0))],
            out_specs=pl.BlockSpec((B, tv), lambda j: (0, j))),
        compiler_params=pltpu.CompilerParams(
            dimension_semantics=("parallel",)),
    )(x_last, wte_lm)


def gpt_forward(idx, params, config):
    """forwardV2 semantics with targets=None: returns logits (B, 1, V)."""
    B, t = idx.shape
    cl = config['context_len']
    C = config['n_embd']
    V = config['vocab_size']
    wte = params['wte']          # (V, C) f32, used for the embedding gather
    wpe = params['wpe']          # (cl + 1, C) f32

    def forward_v1(window_idx, prev_context):
        tw = window_idx.shape[1]
        t1 = tw + 1
        tok_emb = jnp.take(wte, window_idx, axis=0)                   # (B, tw, C)
        tok_emb = jnp.concatenate([prev_context, tok_emb], axis=1)    # (B, t1, C)
        pos_emb = wpe[:t1]                                            # (t1, C)
        x0 = (tok_emb + pos_emb[None]).astype(jnp.float32)
        t1p = 8 * ((t1 + 7) // 8)      # pad sequence to a sublane multiple of 8
        if t1p != t1:
            x0 = jnp.pad(x0, ((0, 0), (0, t1p - t1), (0, 0)))
        xo = run_blocks(x0, params)                                   # (B, t1p, C)
        return xo[:, :t1, :]           # drop pad rows (never attended by real rows)

    p = 0
    pad = False
    context_embd = jnp.zeros((B, 1, C), jnp.float32)
    window_x = None
    while p < t:
        st = p
        ed = p + cl
        if t % cl != 0 and not pad:
            ed = t % cl
            pad = True
        window_idx = idx[:, st:ed]
        p = ed
        window_x = forward_v1(window_idx, context_embd)
        context_embd = jnp.mean(window_x, axis=1, keepdims=True)

    x_last = window_x[:, -1, :]                                       # (B, C)
    logits = lm_head(x_last, params['wte_lm'])[:, :V]                 # (B, V)
    # TODO(synk): training path (targets / cross-entropy loss) not implemented.
    return logits[:, None, :]                                         # (B, 1, V)


def _round_up(n, m):
    return ((n + m - 1) // m) * m


def init_params(key, config):
    V, C = config['vocab_size'], config['n_embd']
    L, cl = config['n_layer'], config['context_len']
    std = 0.02
    proj_std = 0.02 / math.sqrt(2 * L)
    ks = jax.random.split(key, 6)
    bf16 = jnp.bfloat16

    wte = std * jax.random.normal(ks[0], (V, C), jnp.float32)
    # Tied lm_head weight: stored once in bf16, padded to a lane-dense vocab so the
    # head kernel never does per-call casts or masked partial stores.
    vp = _round_up(V, 2048) if V > 2048 else _round_up(V, 128)
    wte_lm = jnp.zeros((vp, C), bf16).at[:V].set(wte.astype(bf16))

    # TODO(synk): for the weight-bandwidth-bound decode regime, store the big
    # matrices int8 (v5e/v6e) or fp8 (v7x) with dequant fused into the matmuls.
    p = {
        'n_head': config['n_head'],
        'wte': wte,
        'wte_lm': wte_lm,
        'wpe': std * jax.random.normal(ks[1], (cl + 1, C), jnp.float32),
        'ln1_w': jnp.ones((L, 1, C), jnp.float32),
        'ln1_b': jnp.zeros((L, 1, C), jnp.float32),
        # Big matrices stored directly in bf16 in HBM (no per-call astype).
        'qkv_w': (std * jax.random.normal(ks[2], (L, C, 3 * C),
                                          jnp.float32)).astype(bf16),
        'qkv_b': jnp.zeros((L, 1, 3 * C), jnp.float32),
        'aproj_w': (proj_std * jax.random.normal(ks[3], (L, C, C),
                                                 jnp.float32)).astype(bf16),
        'aproj_b': jnp.zeros((L, 1, C), jnp.float32),
        'ln2_w': jnp.ones((L, 1, C), jnp.float32),
        'ln2_b': jnp.zeros((L, 1, C), jnp.float32),
        'fc_w': (std * jax.random.normal(ks[4], (L, C, 4 * C),
                                         jnp.float32)).astype(bf16),
        'fc_b': jnp.zeros((L, 1, 4 * C), jnp.float32),
        'mproj_w': (proj_std * jax.random.normal(ks[5], (L, 4 * C, C),
                                                 jnp.float32)).astype(bf16),
        'mproj_b': jnp.zeros((L, 1, C), jnp.float32),
        'lnf_w': jnp.ones((1, C), jnp.float32),
        'lnf_b': jnp.zeros((1, C), jnp.float32),
    }
    return p


if __name__ == "__main__":
    config = dict(vocab_size=64, n_embd=32, n_head=4, n_layer=2,
                  context_len=8, dropout=0.0, bias=True)

    key = jax.random.PRNGKey(0)
    pkey, ikey, xkey = jax.random.split(key, 3)
    params = init_params(pkey, config)

    B, t = 2, 12   # t > context_len -> exercises the sliding-window forwardV2
    idx = jax.random.randint(ikey, (B, t), 0, config['vocab_size'],
                             dtype=jnp.int32)

    logits = gpt_forward(idx, params, config)
    jax.block_until_ready(logits)
    assert logits.shape == (B, 1, config['vocab_size'])
    assert bool(jnp.all(jnp.isfinite(logits)))

    # Sanity-check the batch-'parallel' (v7x megacore) path against the default.
    x0 = jax.random.normal(xkey, (B, 16, config['n_embd']), jnp.float32)
    y_seq = run_blocks(x0, params, batch_parallel=False)
    y_par = run_blocks(x0, params, batch_parallel=True)
    jax.block_until_ready((y_seq, y_par))
    assert bool(jnp.allclose(y_seq, y_par, atol=1e-4, rtol=1e-4))

    print("KERNEL_OK")
</pallas_src>

<mosaic_0001>
module attributes {stable_mosaic.version = 11 : i64} {
  func.func @gpt_blocks_kernel(%arg0: i32, %arg1: memref<16x32xf32, #tpu.memory_space<vmem>>, %arg2: memref<1x1x32xf32, #tpu.memory_space<vmem>>, %arg3: memref<1x1x32xf32, #tpu.memory_space<vmem>>, %arg4: memref<1x32x96xbf16, #tpu.memory_space<vmem>>, %arg5: memref<1x1x96xf32, #tpu.memory_space<vmem>>, %arg6: memref<1x32x32xbf16, #tpu.memory_space<vmem>>, %arg7: memref<1x1x32xf32, #tpu.memory_space<vmem>>, %arg8: memref<1x1x32xf32, #tpu.memory_space<vmem>>, %arg9: memref<1x1x32xf32, #tpu.memory_space<vmem>>, %arg10: memref<1x32x128xbf16, #tpu.memory_space<vmem>>, %arg11: memref<1x1x128xf32, #tpu.memory_space<vmem>>, %arg12: memref<1x128x32xbf16, #tpu.memory_space<vmem>>, %arg13: memref<1x1x32xf32, #tpu.memory_space<vmem>>, %arg14: memref<1x32xf32, #tpu.memory_space<vmem>>, %arg15: memref<1x32xf32, #tpu.memory_space<vmem>>, %arg16: memref<16x32xf32, #tpu.memory_space<vmem>>, %arg17: memref<16x32xbf16, #tpu.memory_space<vmem>>) attributes {dimension_semantics = [#tpu.dimension_semantics<arbitrary>], iteration_bounds = array<i64: 2>, scalar_prefetch = 0 : i64, scratch_operands = 1 : i64, tpu.core_type = #tpu.core_type<tc>, window_params = [{pipeline_mode = #tpu.pipeline_mode<synchronous>, transform_indices = @transform_0, window_bounds = array<i64: 16, 32>}, {transform_indices = @transform_1, window_bounds = array<i64: 1, 1, 32>}, {transform_indices = @transform_2, window_bounds = array<i64: 1, 1, 32>}, {transform_indices = @transform_3, window_bounds = array<i64: 1, 32, 96>}, {transform_indices = @transform_4, window_bounds = array<i64: 1, 1, 96>}, {transform_indices = @transform_5, window_bounds = array<i64: 1, 32, 32>}, {transform_indices = @transform_6, window_bounds = array<i64: 1, 1, 32>}, {transform_indices = @transform_7, window_bounds = array<i64: 1, 1, 32>}, {transform_indices = @transform_8, window_bounds = array<i64: 1, 1, 32>}, {transform_indices = @transform_9, window_bounds = array<i64: 1, 32, 128>}, {transform_indices = @transform_10, window_bounds = array<i64: 1, 1, 128>}, {transform_indices = @transform_11, window_bounds = array<i64: 1, 128, 32>}, {transform_indices = @transform_12, window_bounds = array<i64: 1, 1, 32>}, {pipeline_mode = #tpu.pipeline_mode<synchronous>, transform_indices = @transform_13, window_bounds = array<i64: 1, 32>}, {pipeline_mode = #tpu.pipeline_mode<synchronous>, transform_indices = @transform_14, window_bounds = array<i64: 1, 32>}, {pipeline_mode = #tpu.pipeline_mode<synchronous>, transform_indices = @transform_15, window_bounds = array<i64: 16, 32>}]} {
    %c0_i32 = arith.constant 0 : i32
    %0 = arith.cmpi eq, %arg0, %c0_i32 : i32
    %1 = arith.extui %0 : i1 to i32
    %c0_i32_0 = arith.constant 0 : i32
    %2 = arith.cmpi ne, %1, %c0_i32_0 : i32
    scf.if %2 {
      %c0_124 = arith.constant 0 : index
      %c0_125 = arith.constant 0 : index
      %315 = vector.load %arg1[%c0_124, %c0_125] : memref<16x32xf32, #tpu.memory_space<vmem>>, vector<16x32xf32>
      %c0_126 = arith.constant 0 : index
      %c0_127 = arith.constant 0 : index
      %316 = vector.load %arg16[%c0_126, %c0_127] : memref<16x32xf32, #tpu.memory_space<vmem>>, vector<16x32xf32>
      tpu.vector_store %arg16[%c0_126, %c0_127], %315 {strides = array<i32>} : memref<16x32xf32, #tpu.memory_space<vmem>>, vector<16x32xf32>,
    } else {
    }
    %c0 = arith.constant 0 : index
    %c0_1 = arith.constant 0 : index
    %c0_2 = arith.constant 0 : index
    %3 = vector.load %arg4[%c0, %c0_1, %c0_2] : memref<1x32x96xbf16, #tpu.memory_space<vmem>>, vector<1x32x96xbf16>
    %4 = vector.shape_cast %3 : vector<1x32x96xbf16> to vector<32x96xbf16>
    %c0_3 = arith.constant 0 : index
    %c0_4 = arith.constant 0 : index
    %c0_5 = arith.constant 0 : index
    %5 = vector.load %arg5[%c0_3, %c0_4, %c0_5] : memref<1x1x96xf32, #tpu.memory_space<vmem>>, vector<1x1x96xf32>
    %6 = vector.shape_cast %5 : vector<1x1x96xf32> to vector<1x96xf32>
    %c0_6 = arith.constant 0 : index
    %c0_7 = arith.constant 0 : index
    %c0_8 = arith.constant 0 : index
    %7 = vector.load %arg6[%c0_6, %c0_7, %c0_8] : memref<1x32x32xbf16, #tpu.memory_space<vmem>>, vector<1x32x32xbf16>
    %8 = vector.shape_cast %7 : vector<1x32x32xbf16> to vector<32x32xbf16>
    %c0_9 = arith.constant 0 : index
    %c0_10 = arith.constant 0 : index
    %c0_11 = arith.constant 0 : index
    %9 = vector.load %arg7[%c0_9, %c0_10, %c0_11] : memref<1x1x32xf32, #tpu.memory_space<vmem>>, vector<1x1x32xf32>
    %10 = vector.shape_cast %9 : vector<1x1x32xf32> to vector<1x32xf32>
    %c0_12 = arith.constant 0 : index
    %c0_13 = arith.constant 0 : index
    %c0_14 = arith.constant 0 : index
    %11 = vector.load %arg10[%c0_12, %c0_13, %c0_14] : memref<1x32x128xbf16, #tpu.memory_space<vmem>>, vector<1x32x128xbf16>
    %12 = vector.shape_cast %11 : vector<1x32x128xbf16> to vector<32x128xbf16>
    %c0_15 = arith.constant 0 : index
    %c0_16 = arith.constant 0 : index
    %c0_17 = arith.constant 0 : index
    %13 = vector.load %arg11[%c0_15, %c0_16, %c0_17] : memref<1x1x128xf32, #tpu.memory_space<vmem>>, vector<1x1x128xf32>
    %14 = vector.shape_cast %13 : vector<1x1x128xf32> to vector<1x128xf32>
    %c0_18 = arith.constant 0 : index
    %c0_19 = arith.constant 0 : index
    %c0_20 = arith.constant 0 : index
    %15 = vector.load %arg12[%c0_18, %c0_19, %c0_20] : memref<1x128x32xbf16, #tpu.memory_space<vmem>>, vector<1x128x32xbf16>
    %16 = vector.shape_cast %15 : vector<1x128x32xbf16> to vector<128x32xbf16>
    %c0_21 = arith.constant 0 : index
    %c0_22 = arith.constant 0 : index
    %c0_23 = arith.constant 0 : index
    %17 = vector.load %arg13[%c0_21, %c0_22, %c0_23] : memref<1x1x32xf32, #tpu.memory_space<vmem>>, vector<1x1x32xf32>
    %18 = vector.shape_cast %17 : vector<1x1x32xf32> to vector<1x32xf32>
    %c0_24 = arith.constant 0 : index
    %c0_25 = arith.constant 0 : index
    %c0_26 = arith.constant 0 : index
    %19 = vector.load %arg2[%c0_24, %c0_25, %c0_26] : memref<1x1x32xf32, #tpu.memory_space<vmem>>, vector<1x1x32xf32>
    %20 = vector.shape_cast %19 : vector<1x1x32xf32> to vector<1x32xf32>
    %c0_27 = arith.constant 0 : index
    %c0_28 = arith.constant 0 : index
    %c0_29 = arith.constant 0 : index
    %21 = vector.load %arg3[%c0_27, %c0_28, %c0_29] : memref<1x1x32xf32, #tpu.memory_space<vmem>>, vector<1x1x32xf32>
    %22 = vector.shape_cast %21 : vector<1x1x32xf32> to vector<1x32xf32>
    %c0_30 = arith.constant 0 : index
    %c0_31 = arith.constant 0 : index
    %c0_32 = arith.constant 0 : index
    %23 = vector.load %arg8[%c0_30, %c0_31, %c0_32] : memref<1x1x32xf32, #tpu.memory_space<vmem>>, vector<1x1x32xf32>
    %24 = vector.shape_cast %23 : vector<1x1x32xf32> to vector<1x32xf32>
    %c0_33 = arith.constant 0 : index
    %c0_34 = arith.constant 0 : index
    %c0_35 = arith.constant 0 : index
    %25 = vector.load %arg9[%c0_33, %c0_34, %c0_35] : memref<1x1x32xf32, #tpu.memory_space<vmem>>, vector<1x1x32xf32>
    %26 = vector.shape_cast %25 : vector<1x1x32xf32> to vector<1x32xf32>
    %c0_36 = arith.constant 0 : index
    %c0_37 = arith.constant 0 : index
    %27 = vector.load %arg14[%c0_36, %c0_37] : memref<1x32xf32, #tpu.memory_space<vmem>>, vector<1x32xf32>
    %c0_38 = arith.constant 0 : index
    %c0_39 = arith.constant 0 : index
    %28 = vector.load %arg15[%c0_38, %c0_39] : memref<1x32xf32, #tpu.memory_space<vmem>>, vector<1x32xf32>
    %29 = tpu.iota {dimensions = array<i32: 0>} : vector<8x8xi32>
    %30 = tpu.iota {dimensions = array<i32: 1>} : vector<8x8xi32>
    %31 = arith.cmpi sle, %30, %29 : vector<8x8xi32>
    %c0_40 = arith.constant 0 : index
    %c0_41 = arith.constant 0 : index
    %32 = vector.load %arg16[%c0_40, %c0_41] : memref<16x32xf32, #tpu.memory_space<vmem>>, vector<16x32xf32>
    %cst = arith.constant dense<0.000000e+00> : vector<16xf32>
    %33 = vector.multi_reduction <add>, %32, %cst [1] : vector<16x32xf32> to vector<16xf32>
    %34 = vector.shape_cast %33 : vector<16xf32> to vector<16x1xf32>
    %cst_42 = arith.constant 3.200000e+01 : f32
    %35 = vector.broadcast %cst_42 : f32 to vector<16x1xf32>
    %36 = arith.divf %34, %35 : vector<16x1xf32>
    %37 = vector.broadcast %36 : vector<16x1xf32> to vector<16x32xf32>
    %38 = arith.subf %32, %37 : vector<16x32xf32>
    %39 = arith.mulf %38, %38 : vector<16x32xf32>
    %cst_43 = arith.constant dense<0.000000e+00> : vector<16xf32>
    %40 = vector.multi_reduction <add>, %39, %cst_43 [1] : vector<16x32xf32> to vector<16xf32>
    %41 = vector.shape_cast %40 : vector<16xf32> to vector<16x1xf32>
    %cst_44 = arith.constant 3.200000e+01 : f32
    %42 = vector.broadcast %cst_44 : f32 to vector<16x1xf32>
    %43 = arith.divf %41, %42 : vector<16x1xf32>
    %44 = vector.broadcast %36 : vector<16x1xf32> to vector<16x32xf32>
    %45 = arith.subf %32, %44 : vector<16x32xf32>
    %cst_45 = arith.constant 9.99999974E-6 : f32
    %46 = vector.broadcast %cst_45 : f32 to vector<16x1xf32>
    %47 = arith.addf %43, %46 : vector<16x1xf32>
    %48 = math.rsqrt %47 : vector<16x1xf32>
    %49 = vector.broadcast %48 : vector<16x1xf32> to vector<16x32xf32>
    %50 = arith.mulf %45, %49 : vector<16x32xf32>
    %51 = vector.broadcast %20 : vector<1x32xf32> to vector<16x32xf32>
    %52 = arith.mulf %50, %51 : vector<16x32xf32>
    %53 = vector.broadcast %22 : vector<1x32xf32> to vector<16x32xf32>
    %54 = arith.addf %52, %53 : vector<16x32xf32>
    %55 = arith.truncf %54 : vector<16x32xf32> to vector<16x32xbf16>
    %cst_46 = arith.constant dense<0.000000e+00> : vector<16x96xf32>
    %56 = tpu.matmul %55, %4, %cst_46 {dimension_numbers = #tpu.dot_dimension_numbers<[1], [0], [0], [1], [0, 0, 1, 1], [], []>} : vector<16x32xbf16>, vector<32x96xbf16>, vector<16x96xf32> -> vector<16x96xf32>
    %57 = vector.broadcast %6 : vector<1x96xf32> to vector<16x96xf32>
    %58 = arith.addf %56, %57 : vector<16x96xf32>
    %59 = vector.extract_strided_slice %58 {offsets = [0, 0], sizes = [8, 32], strides = [1, 1]} : vector<16x96xf32> to vector<8x32xf32>
    %60 = vector.extract_strided_slice %58 {offsets = [0, 32], sizes = [8, 32], strides = [1, 1]} : vector<16x96xf32> to vector<8x32xf32>
    %61 = vector.extract_strided_slice %58 {offsets = [0, 64], sizes = [8, 32], strides = [1, 1]} : vector<16x96xf32> to vector<8x32xf32>
    %62 = vector.extract_strided_slice %59 {offsets = [0, 0], sizes = [8, 8], strides = [1, 1]} : vector<8x32xf32> to vector<8x8xf32>
    %63 = arith.truncf %62 : vector<8x8xf32> to vector<8x8xbf16>
    %64 = vector.extract_strided_slice %60 {offsets = [0, 0], sizes = [8, 8], strides = [1, 1]} : vector<8x32xf32> to vector<8x8xf32>
    %65 = arith.truncf %64 : vector<8x8xf32> to vector<8x8xbf16>
    %66 = vector.extract_strided_slice %61 {offsets = [0, 0], sizes = [8, 8], strides = [1, 1]} : vector<8x32xf32> to vector<8x8xf32>
    %67 = arith.truncf %66 : vector<8x8xf32> to vector<8x8xbf16>
    %cst_47 = arith.constant dense<0.000000e+00> : vector<8x8xf32>
    %68 = tpu.matmul %63, %65, %cst_47 {dimension_numbers = #tpu.dot_dimension_numbers<[1], [1], [0], [0], [0, 0, 1, 0], [], []>} : vector<8x8xbf16>, vector<8x8xbf16>, vector<8x8xf32> -> vector<8x8xf32>
    %cst_48 = arith.constant 0.353553385 : f32
    %69 = vector.broadcast %cst_48 : f32 to vector<8x8xf32>
    %70 = arith.mulf %68, %69 : vector<8x8xf32>
    %cst_49 = arith.constant -1.000000e+30 : f32
    %71 = vector.broadcast %cst_49 : f32 to vector<8x8xf32>
    %72 = arith.select %31, %70, %71 : vector<8x8xi1>, vector<8x8xf32>
    %cst_50 = arith.constant dense<0xFF800000> : vector<8xf32>
    %73 = vector.multi_reduction <maximumf>, %72, %cst_50 [1] : vector<8x8xf32> to vector<8xf32>
    %74 = vector.shape_cast %73 : vector<8xf32> to vector<8x1xf32>
    %75 = vector.broadcast %74 : vector<8x1xf32> to vector<8x8xf32>
    %76 = arith.subf %72, %75 : vector<8x8xf32>
    %77 = math.exp %76 : vector<8x8xf32>
    %cst_51 = arith.constant dense<0.000000e+00> : vector<8xf32>
    %78 = vector.multi_reduction <add>, %77, %cst_51 [1] : vector<8x8xf32> to vector<8xf32>
    %79 = vector.shape_cast %78 : vector<8xf32> to vector<8x1xf32>
    %80 = tpu.reciprocal %79 {approx = true} : vector<8x1xf32> -> vector<8x1xf32>
    %81 = vector.broadcast %80 : vector<8x1xf32> to vector<8x8xf32>
    %82 = arith.mulf %77, %81 : vector<8x8xf32>
    %83 = arith.truncf %82 : vector<8x8xf32> to vector<8x8xbf16>
    %cst_52 = arith.constant dense<0.000000e+00> : vector<8x8xf32>
    %84 = tpu.matmul %83, %67, %cst_52 {dimension_numbers = #tpu.dot_dimension_numbers<[1], [0], [0], [1], [0, 0, 1, 1], [], []>} : vector<8x8xbf16>, vector<8x8xbf16>, vector<8x8xf32> -> vector<8x8xf32>
    %85 = arith.truncf %84 : vector<8x8xf32> to vector<8x8xbf16>
    %c0_53 = arith.constant 0 : index
    %c0_54 = arith.constant 0 : index
    %86 = vector.load %arg17[%c0_53, %c0_54] : memref<16x32xbf16, #tpu.memory_space<vmem>>, vector<8x8xbf16>
    tpu.vector_store %arg17[%c0_53, %c0_54], %85 {strides = array<i32>} : memref<16x32xbf16, #tpu.memory_space<vmem>>, vector<8x8xbf16>,
    %87 = vector.extract_strided_slice %59 {offsets = [0, 8], sizes = [8, 8], strides = [1, 1]} : vector<8x32xf32> to vector<8x8xf32>
    %88 = arith.truncf %87 : vector<8x8xf32> to vector<8x8xbf16>
    %89 = vector.extract_strided_slice %60 {offsets = [0, 8], sizes = [8, 8], strides = [1, 1]} : vector<8x32xf32> to vector<8x8xf32>
    %90 = arith.truncf %89 : vector<8x8xf32> to vector<8x8xbf16>
    %91 = vector.extract_strided_slice %61 {offsets = [0, 8], sizes = [8, 8], strides = [1, 1]} : vector<8x32xf32> to vector<8x8xf32>
    %92 = arith.truncf %91 : vector<8x8xf32> to vector<8x8xbf16>
    %cst_55 = arith.constant dense<0.000000e+00> : vector<8x8xf32>
    %93 = tpu.matmul %88, %90, %cst_55 {dimension_numbers = #tpu.dot_dimension_numbers<[1], [1], [0], [0], [0, 0, 1, 0], [], []>} : vector<8x8xbf16>, vector<8x8xbf16>, vector<8x8xf32> -> vector<8x8xf32>
    %cst_56 = arith.constant 0.353553385 : f32
    %94 = vector.broadcast %cst_56 : f32 to vector<8x8xf32>
    %95 = arith.mulf %93, %94 : vector<8x8xf32>
    %cst_57 = arith.constant -1.000000e+30 : f32
    %96 = vector.broadcast %cst_57 : f32 to vector<8x8xf32>
    %97 = arith.select %31, %95, %96 : vector<8x8xi1>, vector<8x8xf32>
    %cst_58 = arith.constant dense<0xFF800000> : vector<8xf32>
    %98 = vector.multi_reduction <maximumf>, %97, %cst_58 [1] : vector<8x8xf32> to vector<8xf32>
    %99 = vector.shape_cast %98 : vector<8xf32> to vector<8x1xf32>
    %100 = vector.broadcast %99 : vector<8x1xf32> to vector<8x8xf32>
    %101 = arith.subf %97, %100 : vector<8x8xf32>
    %102 = math.exp %101 : vector<8x8xf32>
    %cst_59 = arith.constant dense<0.000000e+00> : vector<8xf32>
    %103 = vector.multi_reduction <add>, %102, %cst_59 [1] : vector<8x8xf32> to vector<8xf32>
    %104 = vector.shape_cast %103 : vector<8xf32> to vector<8x1xf32>
    %105 = tpu.reciprocal %104 {approx = true} : vector<8x1xf32> -> vector<8x1xf32>
    %106 = vector.broadcast %105 : vector<8x1xf32> to vector<8x8xf32>
    %107 = arith.mulf %102, %106 : vector<8x8xf32>
    %108 = arith.truncf %107 : vector<8x8xf32> to vector<8x8xbf16>
    %cst_60 = arith.constant dense<0.000000e+00> : vector<8x8xf32>
    %109 = tpu.matmul %108, %92, %cst_60 {dimension_numbers = #tpu.dot_dimension_numbers<[1], [0], [0], [1], [0, 0, 1, 1], [], []>} : vector<8x8xbf16>, vector<8x8xbf16>, vector<8x8xf32> -> vector<8x8xf32>
    %110 = arith.truncf %109 : vector<8x8xf32> to vector<8x8xbf16>
    %c0_61 = arith.constant 0 : index
    %c8 = arith.constant 8 : index
    %111 = vector.load %arg17[%c0_61, %c8] : memref<16x32xbf16, #tpu.memory_space<vmem>>, vector<8x8xbf16>
    tpu.vector_store %arg17[%c0_61, %c8], %110 {strides = array<i32>} : memref<16x32xbf16, #tpu.memory_space<vmem>>, vector<8x8xbf16>,
    %112 = vector.extract_strided_slice %59 {offsets = [0, 16], sizes = [8, 8], strides = [1, 1]} : vector<8x32xf32> to vector<8x8xf32>
    %113 = arith.truncf %112 : vector<8x8xf32> to vector<8x8xbf16>
    %114 = vector.extract_strided_slice %60 {offsets = [0, 16], sizes = [8, 8], strides = [1, 1]} : vector<8x32xf32> to vector<8x8xf32>
    %115 = arith.truncf %114 : vector<8x8xf32> to vector<8x8xbf16>
    %116 = vector.extract_strided_slice %61 {offsets = [0, 16], sizes = [8, 8], strides = [1, 1]} : vector<8x32xf32> to vector<8x8xf32>
    %117 = arith.truncf %116 : vector<8x8xf32> to vector<8x8xbf16>
    %cst_62 = arith.constant dense<0.000000e+00> : vector<8x8xf32>
    %118 = tpu.matmul %113, %115, %cst_62 {dimension_numbers = #tpu.dot_dimension_numbers<[1], [1], [0], [0], [0, 0, 1, 0], [], []>} : vector<8x8xbf16>, vector<8x8xbf16>, vector<8x8xf32> -> vector<8x8xf32>
    %cst_63 = arith.constant 0.353553385 : f32
    %119 = vector.broadcast %cst_63 : f32 to vector<8x8xf32>
    %120 = arith.mulf %118, %119 : vector<8x8xf32>
    %cst_64 = arith.constant -1.000000e+30 : f32
    %121 = vector.broadcast %cst_64 : f32 to vector<8x8xf32>
    %122 = arith.select %31, %120, %121 : vector<8x8xi1>, vector<8x8xf32>
    %cst_65 = arith.constant dense<0xFF800000> : vector<8xf32>
    %123 = vector.multi_reduction <maximumf>, %122, %cst_65 [1] : vector<8x8xf32> to vector<8xf32>
    %124 = vector.shape_cast %123 : vector<8xf32> to vector<8x1xf32>
    %125 = vector.broadcast %124 : vector<8x1xf32> to vector<8x8xf32>
    %126 = arith.subf %122, %125 : vector<8x8xf32>
    %127 = math.exp %126 : vector<8x8xf32>
    %cst_66 = arith.constant dense<0.000000e+00> : vector<8xf32>
    %128 = vector.multi_reduction <add>, %127, %cst_66 [1] : vector<8x8xf32> to vector<8xf32>
    %129 = vector.shape_cast %128 : vector<8xf32> to vector<8x1xf32>
    %130 = tpu.reciprocal %129 {approx = true} : vector<8x1xf32> -> vector<8x1xf32>
    %131 = vector.broadcast %130 : vector<8x1xf32> to vector<8x8xf32>
    %132 = arith.mulf %127, %131 : vector<8x8xf32>
    %133 = arith.truncf %132 : vector<8x8xf32> to vector<8x8xbf16>
    %cst_67 = arith.constant dense<0.000000e+00> : vector<8x8xf32>
    %134 = tpu.matmul %133, %117, %cst_67 {dimension_numbers = #tpu.dot_dimension_numbers<[1], [0], [0], [1], [0, 0, 1, 1], [], []>} : vector<8x8xbf16>, vector<8x8xbf16>, vector<8x8xf32> -> vector<8x8xf32>
    %135 = arith.truncf %134 : vector<8x8xf32> to vector<8x8xbf16>
    %c0_68 = arith.constant 0 : index
    %c16 = arith.constant 16 : index
    %136 = vector.load %arg17[%c0_68, %c16] : memref<16x32xbf16, #tpu.memory_space<vmem>>, vector<8x8xbf16>
    tpu.vector_store %arg17[%c0_68, %c16], %135 {strides = array<i32>} : memref<16x32xbf16, #tpu.memory_space<vmem>>, vector<8x8xbf16>,
    %137 = vector.extract_strided_slice %59 {offsets = [0, 24], sizes = [8, 8], strides = [1, 1]} : vector<8x32xf32> to vector<8x8xf32>
    %138 = arith.truncf %137 : vector<8x8xf32> to vector<8x8xbf16>
    %139 = vector.extract_strided_slice %60 {offsets = [0, 24], sizes = [8, 8], strides = [1, 1]} : vector<8x32xf32> to vector<8x8xf32>
    %140 = arith.truncf %139 : vector<8x8xf32> to vector<8x8xbf16>
    %141 = vector.extract_strided_slice %61 {offsets = [0, 24], sizes = [8, 8], strides = [1, 1]} : vector<8x32xf32> to vector<8x8xf32>
    %142 = arith.truncf %141 : vector<8x8xf32> to vector<8x8xbf16>
    %cst_69 = arith.constant dense<0.000000e+00> : vector<8x8xf32>
    %143 = tpu.matmul %138, %140, %cst_69 {dimension_numbers = #tpu.dot_dimension_numbers<[1], [1], [0], [0], [0, 0, 1, 0], [], []>} : vector<8x8xbf16>, vector<8x8xbf16>, vector<8x8xf32> -> vector<8x8xf32>
    %cst_70 = arith.constant 0.353553385 : f32
    %144 = vector.broadcast %cst_70 : f32 to vector<8x8xf32>
    %145 = arith.mulf %143, %144 : vector<8x8xf32>
    %cst_71 = arith.constant -1.000000e+30 : f32
    %146 = vector.broadcast %cst_71 : f32 to vector<8x8xf32>
    %147 = arith.select %31, %145, %146 : vector<8x8xi1>, vector<8x8xf32>
    %cst_72 = arith.constant dense<0xFF800000> : vector<8xf32>
    %148 = vector.multi_reduction <maximumf>, %147, %cst_72 [1] : vector<8x8xf32> to vector<8xf32>
    %149 = vector.shape_cast %148 : vector<8xf32> to vector<8x1xf32>
    %150 = vector.broadcast %149 : vector<8x1xf32> to vector<8x8xf32>
    %151 = arith.subf %147, %150 : vector<8x8xf32>
    %152 = math.exp %151 : vector<8x8xf32>
    %cst_73 = arith.constant dense<0.000000e+00> : vector<8xf32>
    %153 = vector.multi_reduction <add>, %152, %cst_73 [1] : vector<8x8xf32> to vector<8xf32>
    %154 = vector.shape_cast %153 : vector<8xf32> to vector<8x1xf32>
    %155 = tpu.reciprocal %154 {approx = true} : vector<8x1xf32> -> vector<8x1xf32>
    %156 = vector.broadcast %155 : vector<8x1xf32> to vector<8x8xf32>
    %157 = arith.mulf %152, %156 : vector<8x8xf32>
    %158 = arith.truncf %157 : vector<8x8xf32> to vector<8x8xbf16>
    %cst_74 = arith.constant dense<0.000000e+00> : vector<8x8xf32>
    %159 = tpu.matmul %158, %142, %cst_74 {dimension_numbers = #tpu.dot_dimension_numbers<[1], [0], [0], [1], [0, 0, 1, 1], [], []>} : vector<8x8xbf16>, vector<8x8xbf16>, vector<8x8xf32> -> vector<8x8xf32>
    %160 = arith.truncf %159 : vector<8x8xf32> to vector<8x8xbf16>
    %c0_75 = arith.constant 0 : index
    %c24 = arith.constant 24 : index
    %161 = vector.load %arg17[%c0_75, %c24] : memref<16x32xbf16, #tpu.memory_space<vmem>>, vector<8x8xbf16>
    tpu.vector_store %arg17[%c0_75, %c24], %160 {strides = array<i32>} : memref<16x32xbf16, #tpu.memory_space<vmem>>, vector<8x8xbf16>,
    %162 = vector.extract_strided_slice %58 {offsets = [8, 0], sizes = [8, 32], strides = [1, 1]} : vector<16x96xf32> to vector<8x32xf32>
    %163 = vector.extract_strided_slice %58 {offsets = [8, 32], sizes = [8, 32], strides = [1, 1]} : vector<16x96xf32> to vector<8x32xf32>
    %164 = vector.extract_strided_slice %58 {offsets = [8, 64], sizes = [8, 32], strides = [1, 1]} : vector<16x96xf32> to vector<8x32xf32>
    %165 = vector.extract_strided_slice %162 {offsets = [0, 0], sizes = [8, 8], strides = [1, 1]} : vector<8x32xf32> to vector<8x8xf32>
    %166 = arith.truncf %165 : vector<8x8xf32> to vector<8x8xbf16>
    %167 = vector.extract_strided_slice %163 {offsets = [0, 0], sizes = [8, 8], strides = [1, 1]} : vector<8x32xf32> to vector<8x8xf32>
    %168 = arith.truncf %167 : vector<8x8xf32> to vector<8x8xbf16>
    %169 = vector.extract_strided_slice %164 {offsets = [0, 0], sizes = [8, 8], strides = [1, 1]} : vector<8x32xf32> to vector<8x8xf32>
    %170 = arith.truncf %169 : vector<8x8xf32> to vector<8x8xbf16>
    %cst_76 = arith.constant dense<0.000000e+00> : vector<8x8xf32>
    %171 = tpu.matmul %166, %168, %cst_76 {dimension_numbers = #tpu.dot_dimension_numbers<[1], [1], [0], [0], [0, 0, 1, 0], [], []>} : vector<8x8xbf16>, vector<8x8xbf16>, vector<8x8xf32> -> vector<8x8xf32>
    %cst_77 = arith.constant 0.353553385 : f32
    %172 = vector.broadcast %cst_77 : f32 to vector<8x8xf32>
    %173 = arith.mulf %171, %172 : vector<8x8xf32>
    %cst_78 = arith.constant -1.000000e+30 : f32
    %174 = vector.broadcast %cst_78 : f32 to vector<8x8xf32>
    %175 = arith.select %31, %173, %174 : vector<8x8xi1>, vector<8x8xf32>
    %cst_79 = arith.constant dense<0xFF800000> : vector<8xf32>
    %176 = vector.multi_reduction <maximumf>, %175, %cst_79 [1] : vector<8x8xf32> to vector<8xf32>
    %177 = vector.shape_cast %176 : vector<8xf32> to vector<8x1xf32>
    %178 = vector.broadcast %177 : vector<8x1xf32> to vector<8x8xf32>
    %179 = arith.subf %175, %178 : vector<8x8xf32>
    %180 = math.exp %179 : vector<8x8xf32>
    %cst_80 = arith.constant dense<0.000000e+00> : vector<8xf32>
    %181 = vector.multi_reduction <add>, %180, %cst_80 [1] : vector<8x8xf32> to vector<8xf32>
    %182 = vector.shape_cast %181 : vector<8xf32> to vector<8x1xf32>
    %183 = tpu.reciprocal %182 {approx = true} : vector<8x1xf32> -> vector<8x1xf32>
    %184 = vector.broadcast %183 : vector<8x1xf32> to vector<8x8xf32>
    %185 = arith.mulf %180, %184 : vector<8x8xf32>
    %186 = arith.truncf %185 : vector<8x8xf32> to vector<8x8xbf16>
    %cst_81 = arith.constant dense<0.000000e+00> : vector<8x8xf32>
    %187 = tpu.matmul %186, %170, %cst_81 {dimension_numbers = #tpu.dot_dimension_numbers<[1], [0], [0], [1], [0, 0, 1, 1], [], []>} : vector<8x8xbf16>, vector<8x8xbf16>, vector<8x8xf32> -> vector<8x8xf32>
    %188 = arith.truncf %187 : vector<8x8xf32> to vector<8x8xbf16>
    %c8_82 = arith.constant 8 : index
    %c0_83 = arith.constant 0 : index
    %189 = vector.load %arg17[%c8_82, %c0_83] : memref<16x32xbf16, #tpu.memory_space<vmem>>, vector<8x8xbf16>
    tpu.vector_store %arg17[%c8_82, %c0_83], %188 {strides = array<i32>} : memref<16x32xbf16, #tpu.memory_space<vmem>>, vector<8x8xbf16>,
    %190 = vector.extract_strided_slice %162 {offsets = [0, 8], sizes = [8, 8], strides = [1, 1]} : vector<8x32xf32> to vector<8x8xf32>
    %191 = arith.truncf %190 : vector<8x8xf32> to vector<8x8xbf16>
    %192 = vector.extract_strided_slice %163 {offsets = [0, 8], sizes = [8, 8], strides = [1, 1]} : vector<8x32xf32> to vector<8x8xf32>
    %193 = arith.truncf %192 : vector<8x8xf32> to vector<8x8xbf16>
    %194 = vector.extract_strided_slice %164 {offsets = [0, 8], sizes = [8, 8], strides = [1, 1]} : vector<8x32xf32> to vector<8x8xf32>
    %195 = arith.truncf %194 : vector<8x8xf32> to vector<8x8xbf16>
    %cst_84 = arith.constant dense<0.000000e+00> : vector<8x8xf32>
    %196 = tpu.matmul %191, %193, %cst_84 {dimension_numbers = #tpu.dot_dimension_numbers<[1], [1], [0], [0], [0, 0, 1, 0], [], []>} : vector<8x8xbf16>, vector<8x8xbf16>, vector<8x8xf32> -> vector<8x8xf32>
    %cst_85 = arith.constant 0.353553385 : f32
    %197 = vector.broadcast %cst_85 : f32 to vector<8x8xf32>
    %198 = arith.mulf %196, %197 : vector<8x8xf32>
    %cst_86 = arith.constant -1.000000e+30 : f32
    %199 = vector.broadcast %cst_86 : f32 to vector<8x8xf32>
    %200 = arith.select %31, %198, %199 : vector<8x8xi1>, vector<8x8xf32>
    %cst_87 = arith.constant dense<0xFF800000> : vector<8xf32>
    %201 = vector.multi_reduction <maximumf>, %200, %cst_87 [1] : vector<8x8xf32> to vector<8xf32>
    %202 = vector.shape_cast %201 : vector<8xf32> to vector<8x1xf32>
    %203 = vector.broadcast %202 : vector<8x1xf32> to vector<8x8xf32>
    %204 = arith.subf %200, %203 : vector<8x8xf32>
    %205 = math.exp %204 : vector<8x8xf32>
    %cst_88 = arith.constant dense<0.000000e+00> : vector<8xf32>
    %206 = vector.multi_reduction <add>, %205, %cst_88 [1] : vector<8x8xf32> to vector<8xf32>
    %207 = vector.shape_cast %206 : vector<8xf32> to vector<8x1xf32>
    %208 = tpu.reciprocal %207 {approx = true} : vector<8x1xf32> -> vector<8x1xf32>
    %209 = vector.broadcast %208 : vector<8x1xf32> to vector<8x8xf32>
    %210 = arith.mulf %205, %209 : vector<8x8xf32>
    %211 = arith.truncf %210 : vector<8x8xf32> to vector<8x8xbf16>
    %cst_89 = arith.constant dense<0.000000e+00> : vector<8x8xf32>
    %212 = tpu.matmul %211, %195, %cst_89 {dimension_numbers = #tpu.dot_dimension_numbers<[1], [0], [0], [1], [0, 0, 1, 1], [], []>} : vector<8x8xbf16>, vector<8x8xbf16>, vector<8x8xf32> -> vector<8x8xf32>
    %213 = arith.truncf %212 : vector<8x8xf32> to vector<8x8xbf16>
    %c8_90 = arith.constant 8 : index
    %c8_91 = arith.constant 8 : index
    %214 = vector.load %arg17[%c8_90, %c8_91] : memref<16x32xbf16, #tpu.memory_space<vmem>>, vector<8x8xbf16>
    tpu.vector_store %arg17[%c8_90, %c8_91], %213 {strides = array<i32>} : memref<16x32xbf16, #tpu.memory_space<vmem>>, vector<8x8xbf16>,
    %215 = vector.extract_strided_slice %162 {offsets = [0, 16], sizes = [8, 8], strides = [1, 1]} : vector<8x32xf32> to vector<8x8xf32>
    %216 = arith.truncf %215 : vector<8x8xf32> to vector<8x8xbf16>
    %217 = vector.extract_strided_slice %163 {offsets = [0, 16], sizes = [8, 8], strides = [1, 1]} : vector<8x32xf32> to vector<8x8xf32>
    %218 = arith.truncf %217 : vector<8x8xf32> to vector<8x8xbf16>
    %219 = vector.extract_strided_slice %164 {offsets = [0, 16], sizes = [8, 8], strides = [1, 1]} : vector<8x32xf32> to vector<8x8xf32>
    %220 = arith.truncf %219 : vector<8x8xf32> to vector<8x8xbf16>
    %cst_92 = arith.constant dense<0.000000e+00> : vector<8x8xf32>
    %221 = tpu.matmul %216, %218, %cst_92 {dimension_numbers = #tpu.dot_dimension_numbers<[1], [1], [0], [0], [0, 0, 1, 0], [], []>} : vector<8x8xbf16>, vector<8x8xbf16>, vector<8x8xf32> -> vector<8x8xf32>
    %cst_93 = arith.constant 0.353553385 : f32
    %222 = vector.broadcast %cst_93 : f32 to vector<8x8xf32>
    %223 = arith.mulf %221, %222 : vector<8x8xf32>
    %cst_94 = arith.constant -1.000000e+30 : f32
    %224 = vector.broadcast %cst_94 : f32 to vector<8x8xf32>
    %225 = arith.select %31, %223, %224 : vector<8x8xi1>, vector<8x8xf32>
    %cst_95 = arith.constant dense<0xFF800000> : vector<8xf32>
    %226 = vector.multi_reduction <maximumf>, %225, %cst_95 [1] : vector<8x8xf32> to vector<8xf32>
    %227 = vector.shape_cast %226 : vector<8xf32> to vector<8x1xf32>
    %228 = vector.broadcast %227 : vector<8x1xf32> to vector<8x8xf32>
    %229 = arith.subf %225, %228 : vector<8x8xf32>
    %230 = math.exp %229 : vector<8x8xf32>
    %cst_96 = arith.constant dense<0.000000e+00> : vector<8xf32>
    %231 = vector.multi_reduction <add>, %230, %cst_96 [1] : vector<8x8xf32> to vector<8xf32>
    %232 = vector.shape_cast %231 : vector<8xf32> to vector<8x1xf32>
    %233 = tpu.reciprocal %232 {approx = true} : vector<8x1xf32> -> vector<8x1xf32>
    %234 = vector.broadcast %233 : vector<8x1xf32> to vector<8x8xf32>
    %235 = arith.mulf %230, %234 : vector<8x8xf32>
    %236 = arith.truncf %235 : vector<8x8xf32> to vector<8x8xbf16>
    %cst_97 = arith.constant dense<0.000000e+00> : vector<8x8xf32>
    %237 = tpu.matmul %236, %220, %cst_97 {dimension_numbers = #tpu.dot_dimension_numbers<[1], [0], [0], [1], [0, 0, 1, 1], [], []>} : vector<8x8xbf16>, vector<8x8xbf16>, vector<8x8xf32> -> vector<8x8xf32>
    %238 = arith.truncf %237 : vector<8x8xf32> to vector<8x8xbf16>
    %c8_98 = arith.constant 8 : index
    %c16_99 = arith.constant 16 : index
    %239 = vector.load %arg17[%c8_98, %c16_99] : memref<16x32xbf16, #tpu.memory_space<vmem>>, vector<8x8xbf16>
    tpu.vector_store %arg17[%c8_98, %c16_99], %238 {strides = array<i32>} : memref<16x32xbf16, #tpu.memory_space<vmem>>, vector<8x8xbf16>,
    %240 = vector.extract_strided_slice %162 {offsets = [0, 24], sizes = [8, 8], strides = [1, 1]} : vector<8x32xf32> to vector<8x8xf32>
    %241 = arith.truncf %240 : vector<8x8xf32> to vector<8x8xbf16>
    %242 = vector.extract_strided_slice %163 {offsets = [0, 24], sizes = [8, 8], strides = [1, 1]} : vector<8x32xf32> to vector<8x8xf32>
    %243 = arith.truncf %242 : vector<8x8xf32> to vector<8x8xbf16>
    %244 = vector.extract_strided_slice %164 {offsets = [0, 24], sizes = [8, 8], strides = [1, 1]} : vector<8x32xf32> to vector<8x8xf32>
    %245 = arith.truncf %244 : vector<8x8xf32> to vector<8x8xbf16>
    %cst_100 = arith.constant dense<0.000000e+00> : vector<8x8xf32>
    %246 = tpu.matmul %241, %243, %cst_100 {dimension_numbers = #tpu.dot_dimension_numbers<[1], [1], [0], [0], [0, 0, 1, 0], [], []>} : vector<8x8xbf16>, vector<8x8xbf16>, vector<8x8xf32> -> vector<8x8xf32>
    %cst_101 = arith.constant 0.353553385 : f32
    %247 = vector.broadcast %cst_101 : f32 to vector<8x8xf32>
    %248 = arith.mulf %246, %247 : vector<8x8xf32>
    %cst_102 = arith.constant -1.000000e+30 : f32
    %249 = vector.broadcast %cst_102 : f32 to vector<8x8xf32>
    %250 = arith.select %31, %248, %249 : vector<8x8xi1>, vector<8x8xf32>
    %cst_103 = arith.constant dense<0xFF800000> : vector<8xf32>
    %251 = vector.multi_reduction <maximumf>, %250, %cst_103 [1] : vector<8x8xf32> to vector<8xf32>
    %252 = vector.shape_cast %251 : vector<8xf32> to vector<8x1xf32>
    %253 = vector.broadcast %252 : vector<8x1xf32> to vector<8x8xf32>
    %254 = arith.subf %250, %253 : vector<8x8xf32>
    %255 = math.exp %254 : vector<8x8xf32>
    %cst_104 = arith.constant dense<0.000000e+00> : vector<8xf32>
    %256 = vector.multi_reduction <add>, %255, %cst_104 [1] : vector<8x8xf32> to vector<8xf32>
    %257 = vector.shape_cast %256 : vector<8xf32> to vector<8x1xf32>
    %258 = tpu.reciprocal %257 {approx = true} : vector<8x1xf32> -> vector<8x1xf32>
    %259 = vector.broadcast %258 : vector<8x1xf32> to vector<8x8xf32>
    %260 = arith.mulf %255, %259 : vector<8x8xf32>
    %261 = arith.truncf %260 : vector<8x8xf32> to vector<8x8xbf16>
    %cst_105 = arith.constant dense<0.000000e+00> : vector<8x8xf32>
    %262 = tpu.matmul %261, %245, %cst_105 {dimension_numbers = #tpu.dot_dimension_numbers<[1], [0], [0], [1], [0, 0, 1, 1], [], []>} : vector<8x8xbf16>, vector<8x8xbf16>, vector<8x8xf32> -> vector<8x8xf32>
    %263 = arith.truncf %262 : vector<8x8xf32> to vector<8x8xbf16>
    %c8_106 = arith.constant 8 : index
    %c24_107 = arith.constant 24 : index
    %264 = vector.load %arg17[%c8_106, %c24_107] : memref<16x32xbf16, #tpu.memory_space<vmem>>, vector<8x8xbf16>
    tpu.vector_store %arg17[%c8_106, %c24_107], %263 {strides = array<i32>} : memref<16x32xbf16, #tpu.memory_space<vmem>>, vector<8x8xbf16>,
    %c0_108 = arith.constant 0 : index
    %c0_109 = arith.constant 0 : index
    %265 = vector.load %arg17[%c0_108, %c0_109] : memref<16x32xbf16, #tpu.memory_space<vmem>>, vector<16x32xbf16>
    %cst_110 = arith.constant dense<0.000000e+00> : vector<16x32xf32>
    %266 = tpu.matmul %265, %8, %cst_110 {dimension_numbers = #tpu.dot_dimension_numbers<[1], [0], [0], [1], [0, 0, 1, 1], [], []>} : vector<16x32xbf16>, vector<32x32xbf16>, vector<16x32xf32> -> vector<16x32xf32>
    %267 = vector.broadcast %10 : vector<1x32xf32> to vector<16x32xf32>
    %268 = arith.addf %266, %267 : vector<16x32xf32>
    %269 = arith.addf %32, %268 : vector<16x32xf32>
    %cst_111 = arith.constant dense<0.000000e+00> : vector<16xf32>
    %270 = vector.multi_reduction <add>, %269, %cst_111 [1] : vector<16x32xf32> to vector<16xf32>
    %271 = vector.shape_cast %270 : vector<16xf32> to vector<16x1xf32>
    %cst_112 = arith.constant 3.200000e+01 : f32
    %272 = vector.broadcast %cst_112 : f32 to vector<16x1xf32>
    %273 = arith.divf %271, %272 : vector<16x1xf32>
    %274 = vector.broadcast %273 : vector<16x1xf32> to vector<16x32xf32>
    %275 = arith.subf %269, %274 : vector<16x32xf32>
    %276 = arith.mulf %275, %275 : vector<16x32xf32>
    %cst_113 = arith.constant dense<0.000000e+00> : vector<16xf32>
    %277 = vector.multi_reduction <add>, %276, %cst_113 [1] : vector<16x32xf32> to vector<16xf32>
    %278 = vector.shape_cast %277 : vector<16xf32> to vector<16x1xf32>
    %cst_114 = arith.constant 3.200000e+01 : f32
    %279 = vector.broadcast %cst_114 : f32 to vector<16x1xf32>
    %280 = arith.divf %278, %279 : vector<16x1xf32>
    %281 = vector.broadcast %273 : vector<16x1xf32> to vector<16x32xf32>
    %282 = arith.subf %269, %281 : vector<16x32xf32>
    %cst_115 = arith.constant 9.99999974E-6 : f32
    %283 = vector.broadcast %cst_115 : f32 to vector<16x1xf32>
    %284 = arith.addf %280, %283 : vector<16x1xf32>
    %285 = math.rsqrt %284 : vector<16x1xf32>
    %286 = vector.broadcast %285 : vector<16x1xf32> to vector<16x32xf32>
    %287 = arith.mulf %282, %286 : vector<16x32xf32>
    %288 = vector.broadcast %24 : vector<1x32xf32> to vector<16x32xf32>
    %289 = arith.mulf %287, %288 : vector<16x32xf32>
    %290 = vector.broadcast %26 : vector<1x32xf32> to vector<16x32xf32>
    %291 = arith.addf %289, %290 : vector<16x32xf32>
    %292 = arith.truncf %291 : vector<16x32xf32> to vector<16x32xbf16>
    %cst_116 = arith.constant dense<0.000000e+00> : vector<16x128xf32>
    %293 = tpu.matmul %292, %12, %cst_116 {dimension_numbers = #tpu.dot_dimension_numbers<[1], [0], [0], [1], [0, 0, 1, 1], [], []>} : vector<16x32xbf16>, vector<32x128xbf16>, vector<16x128xf32> -> vector<16x128xf32>
    %294 = vector.broadcast %14 : vector<1x128xf32> to vector<16x128xf32>
    %295 = arith.addf %293, %294 : vector<16x128xf32>
    %cst_117 = arith.constant 5.000000e-01 : f32
    %296 = vector.broadcast %cst_117 : f32 to vector<16x128xf32>
    %297 = arith.mulf %296, %295 : vector<16x128xf32>
    %cst_118 = arith.constant 0.707106769 : f32
    %298 = vector.broadcast %cst_118 : f32 to vector<16x128xf32>
    %299 = arith.mulf %295, %298 : vector<16x128xf32>
    %300 = math.erf %299 : vector<16x128xf32>
    %cst_119 = arith.constant 1.000000e+00 : f32
    %301 = vector.broadcast %cst_119 : f32 to vector<16x128xf32>
    %302 = arith.addf %301, %300 : vector<16x128xf32>
    %303 = arith.mulf %297, %302 : vector<16x128xf32>
    %304 = arith.truncf %303 : vector<16x128xf32> to vector<16x128xbf16>
    %cst_120 = arith.constant dense<0.000000e+00> : vector<16x32xf32>
    %305 = tpu.matmul %304, %16, %cst_120 {dimension_numbers = #tpu.dot_dimension_numbers<[1], [0], [0], [1], [0, 0, 1, 1], [], []>} : vector<16x128xbf16>, vector<128x32xbf16>, vector<16x32xf32> -> vector<16x32xf32>
    %306 = arith.addf %269, %305 : vector<16x32xf32>
    %307 = vector.broadcast %18 : vector<1x32xf32> to vector<16x32xf32>
    %308 = arith.addf %306, %307 : vector<16x32xf32>
    %c1_i32 = arith.constant 1 : i32
    %309 = arith.cmpi slt, %arg0, %c1_i32 : i32
    %310 = arith.extui %309 : i1 to i32
    %c0_i32_121 = arith.constant 0 : i32
    %311 = arith.cmpi ne, %310, %c0_i32_121 : i32
    scf.if %311 {
      %c0_124 = arith.constant 0 : index
      %c0_125 = arith.constant 0 : index
      %315 = vector.load %arg16[%c0_124, %c0_125] : memref<16x32xf32, #tpu.memory_space<vmem>>, vector<16x32xf32>
      tpu.vector_store %arg16[%c0_124, %c0_125], %308 {strides = array<i32>} : memref<16x32xf32, #tpu.memory_space<vmem>>, vector<16x32xf32>,
    } else {
    }
    %c1_i32_122 = arith.constant 1 : i32
    %312 = arith.cmpi eq, %arg0, %c1_i32_122 : i32
    %313 = arith.extui %312 : i1 to i32
    %c0_i32_123 = arith.constant 0 : i32
    %314 = arith.cmpi ne, %313, %c0_i32_123 : i32
    scf.if %314 {
      %cst_124 = arith.constant dense<0.000000e+00> : vector<16xf32>
      %315 = vector.multi_reduction <add>, %308, %cst_124 [1] : vector<16x32xf32> to vector<16xf32>
      %316 = vector.shape_cast %315 : vector<16xf32> to vector<16x1xf32>
      %cst_125 = arith.constant 3.200000e+01 : f32
      %317 = vector.broadcast %cst_125 : f32 to vector<16x1xf32>
      %318 = arith.divf %316, %317 : vector<16x1xf32>
      %319 = vector.broadcast %318 : vector<16x1xf32> to vector<16x32xf32>
      %320 = arith.subf %308, %319 : vector<16x32xf32>
      %321 = arith.mulf %320, %320 : vector<16x32xf32>
      %cst_126 = arith.constant dense<0.000000e+00> : vector<16xf32>
      %322 = vector.multi_reduction <add>, %321, %cst_126 [1] : vector<16x32xf32> to vector<16xf32>
      %323 = vector.shape_cast %322 : vector<16xf32> to vector<16x1xf32>
      %cst_127 = arith.constant 3.200000e+01 : f32
      %324 = vector.broadcast %cst_127 : f32 to vector<16x1xf32>
      %325 = arith.divf %323, %324 : vector<16x1xf32>
      %326 = vector.broadcast %318 : vector<16x1xf32> to vector<16x32xf32>
      %327 = arith.subf %308, %326 : vector<16x32xf32>
      %cst_128 = arith.constant 9.99999974E-6 : f32
      %328 = vector.broadcast %cst_128 : f32 to vector<16x1xf32>
      %329 = arith.addf %325, %328 : vector<16x1xf32>
      %330 = math.rsqrt %329 : vector<16x1xf32>
      %331 = vector.broadcast %330 : vector<16x1xf32> to vector<16x32xf32>
      %332 = arith.mulf %327, %331 : vector<16x32xf32>
      %333 = vector.broadcast %27 : vector<1x32xf32> to vector<16x32xf32>
      %334 = arith.mulf %332, %333 : vector<16x32xf32>
      %335 = vector.broadcast %28 : vector<1x32xf32> to vector<16x32xf32>
      %336 = arith.addf %334, %335 : vector<16x32xf32>
      %c0_129 = arith.constant 0 : index
      %c0_130 = arith.constant 0 : index
      %337 = vector.load %arg16[%c0_129, %c0_130] : memref<16x32xf32, #tpu.memory_space<vmem>>, vector<16x32xf32>
      tpu.vector_store %arg16[%c0_129, %c0_130], %336 {strides = array<i32>} : memref<16x32xf32, #tpu.memory_space<vmem>>, vector<16x32xf32>,
    } else {
    }
    return
  }
  func.func @transform_0(%arg0: i32) -> (i32, i32) {
    %c0_i32 = arith.constant 0 : i32
    %c0_i32_0 = arith.constant 0 : i32
    %c0_i32_1 = arith.constant 0 : i32
    return %c0_i32, %c0_i32_0 : i32, i32
  }
  func.func @transform_1(%arg0: i32) -> (i32, i32, i32) {
    %c0_i32 = arith.constant 0 : i32
    %c0_i32_0 = arith.constant 0 : i32
    %c0_i32_1 = arith.constant 0 : i32
    return %arg0, %c0_i32, %c0_i32_0 : i32, i32, i32
  }
  func.func @transform_2(%arg0: i32) -> (i32, i32, i32) {
    %c0_i32 = arith.constant 0 : i32
    %c0_i32_0 = arith.constant 0 : i32
    %c0_i32_1 = arith.constant 0 : i32
    return %arg0, %c0_i32, %c0_i32_0 : i32, i32, i32
  }
  func.func @transform_3(%arg0: i32) -> (i32, i32, i32) {
    %c0_i32 = arith.constant 0 : i32
    %c0_i32_0 = arith.constant 0 : i32
    %c0_i32_1 = arith.constant 0 : i32
    return %arg0, %c0_i32, %c0_i32_0 : i32, i32, i32
  }
  func.func @transform_4(%arg0: i32) -> (i32, i32, i32) {
    %c0_i32 = arith.constant 0 : i32
    %c0_i32_0 = arith.constant 0 : i32
    %c0_i32_1 = arith.constant 0 : i32
    return %arg0, %c0_i32, %c0_i32_0 : i32, i32, i32
  }
  func.func @transform_5(%arg0: i32) -> (i32, i32, i32) {
    %c0_i32 = arith.constant 0 : i32
    %c0_i32_0 = arith.constant 0 : i32
    %c0_i32_1 = arith.constant 0 : i32
    return %arg0, %c0_i32, %c0_i32_0 : i32, i32, i32
  }
  func.func @transform_6(%arg0: i32) -> (i32, i32, i32) {
    %c0_i32 = arith.constant 0 : i32
    %c0_i32_0 = arith.constant 0 : i32
    %c0_i32_1 = arith.constant 0 : i32
    return %arg0, %c0_i32, %c0_i32_0 : i32, i32, i32
  }
  func.func @transform_7(%arg0: i32) -> (i32, i32, i32) {
    %c0_i32 = arith.constant 0 : i32
    %c0_i32_0 = arith.constant 0 : i32
    %c0_i32_1 = arith.constant 0 : i32
    return %arg0, %c0_i32, %c0_i32_0 : i32, i32, i32
  }
  func.func @transform_8(%arg0: i32) -> (i32, i32, i32) {
    %c0_i32 = arith.constant 0 : i32
    %c0_i32_0 = arith.constant 0 : i32
    %c0_i32_1 = arith.constant 0 : i32
    return %arg0, %c0_i32, %c0_i32_0 : i32, i32, i32
  }
  func.func @transform_9(%arg0: i32) -> (i32, i32, i32) {
    %c0_i32 = arith.constant 0 : i32
    %c0_i32_0 = arith.constant 0 : i32
    %c0_i32_1 = arith.constant 0 : i32
    return %arg0, %c0_i32, %c0_i32_0 : i32, i32, i32
  }
  func.func @transform_10(%arg0: i32) -> (i32, i32, i32) {
    %c0_i32 = arith.constant 0 : i32
    %c0_i32_0 = arith.constant 0 : i32
    %c0_i32_1 = arith.constant 0 : i32
    return %arg0, %c0_i32, %c0_i32_0 : i32, i32, i32
  }
  func.func @transform_11(%arg0: i32) -> (i32, i32, i32) {
    %c0_i32 = arith.constant 0 : i32
    %c0_i32_0 = arith.constant 0 : i32
    %c0_i32_1 = arith.constant 0 : i32
    return %arg0, %c0_i32, %c0_i32_0 : i32, i32, i32
  }
  func.func @transform_12(%arg0: i32) -> (i32, i32, i32) {
    %c0_i32 = arith.constant 0 : i32
    %c0_i32_0 = arith.constant 0 : i32
    %c0_i32_1 = arith.constant 0 : i32
    return %arg0, %c0_i32, %c0_i32_0 : i32, i32, i32
  }
  func.func @transform_13(%arg0: i32) -> (i32, i32) {
    %c0_i32 = arith.constant 0 : i32
    %c0_i32_0 = arith.constant 0 : i32
    %c0_i32_1 = arith.constant 0 : i32
    return %c0_i32, %c0_i32_0 : i32, i32
  }
  func.func @transform_14(%arg0: i32) -> (i32, i32) {
    %c0_i32 = arith.constant 0 : i32
    %c0_i32_0 = arith.constant 0 : i32
    %c0_i32_1 = arith.constant 0 : i32
    return %c0_i32, %c0_i32_0 : i32, i32
  }
  func.func @transform_15(%arg0: i32) -> (i32, i32) {
    %c0_i32 = arith.constant 0 : i32
    %c0_i32_0 = arith.constant 0 : i32
    %c0_i32_1 = arith.constant 0 : i32
    return %c0_i32, %c0_i32_0 : i32, i32
  }
}

</mosaic_0001>

<llo_original>
// kernel: tpu_custom_call.1
$region0: #{tpu_custom_call.1}
  #allocation0 [shape = 'u32[]', space=smem, size = 0x4, offset = 0x4, fixed_abs, tag = 'smem constant byte address 0x4 - core index']
  #allocation1 [shape = 'u32[144,128]{1,0:T(1,128)}', space=vmem, size = 0x12000, scoped, tag = 'internal scratch']
  #allocation2 [shape = 'bf16[16,32]{1,0:T(8,128)(2,1)}', space=vmem, size = 0x1000, scoped, tag = 'scratch operand']
  %s0 = inlined_call_operand.hbm [shape: f32[16,32], index: 0, kind: input, shape index: {}, may-alias: {0,15}]
  %s1 = inlined_call_operand.vmem [shape: f32[2,1,32], index: 1, kind: input, shape index: {}]
  %s2 = inlined_call_operand.vmem [shape: f32[2,1,32], index: 2, kind: input, shape index: {}]
  %s3 = inlined_call_operand.vmem [shape: bf16[2,32,96], index: 3, kind: input, shape index: {}]
  %s4 = inlined_call_operand.vmem [shape: f32[2,1,96], index: 4, kind: input, shape index: {}]
  %s5 = inlined_call_operand.vmem [shape: bf16[2,32,32], index: 5, kind: input, shape index: {}]
  %s6 = inlined_call_operand.vmem [shape: f32[2,1,32], index: 6, kind: input, shape index: {}]
  %s7 = inlined_call_operand.vmem [shape: f32[2,1,32], index: 7, kind: input, shape index: {}]
  %s8 = inlined_call_operand.vmem [shape: f32[2,1,32], index: 8, kind: input, shape index: {}]
  %s9 = inlined_call_operand.vmem [shape: bf16[2,32,128], index: 9, kind: input, shape index: {}]
  %s10 = inlined_call_operand.vmem [shape: f32[2,1,128], index: 10, kind: input, shape index: {}]
  %s11 = inlined_call_operand.vmem [shape: bf16[2,128,32], index: 11, kind: input, shape index: {}]
  %s12 = inlined_call_operand.vmem [shape: f32[2,1,32], index: 12, kind: input, shape index: {}]
  %s13 = inlined_call_operand.vmem [shape: f32[1,32], index: 13, kind: input, shape index: {}]
  %s14 = inlined_call_operand.vmem [shape: f32[1,32], index: 14, kind: input, shape index: {}]
  %s15 = inlined_call_operand.hbm [shape: f32[16,32], index: 15, kind: output, shape index: {}, may-alias: {0,15}]
  %s16 = sld [smem:[#allocation0]]
  $region109: #{tpu_custom_call.1} parent=0
    _
  %s18 = ssub.s32 1, %s16
  %s19 = scalar_select 0, %s18, %s16
  $region1: #{tpu_custom_call.1} parent=0
    #allocation3 [shape = 'u8[8192]{0}', space=vmem, size = 0x2000, scoped, tag = 'input window, operand 0, single buffered']
    #allocation4 [shape = 's32[2]{0}', space=sflag, size = 0x8, scoped, tag = 'scoped memory for tpu_custom_call.1']
    #allocation5 [shape = 's32[2]{0}', space=sflag, size = 0x8, scoped, tag = 'scoped memory for tpu_custom_call.1']
    #allocation6 [shape = 'u8[8192]{0}', space=vmem, size = 0x2000, scoped, tag = 'output window, operand 0, single buffered']
    %20 = vsyncpa [#allocation4], 0
    %21 = vsyncpa [#allocation5], 0
    loop: start=0, step=1, limit=4
    $region2: #{tpu_custom_call.1} parent=1 // loop_pre_header
      _
    $region3: #{tpu_custom_call.1} parent=1 // loop_header
      %s23 = sphi 0, %s27
      %p24 = scmp.ge.s32.totalorder %s23, 4
      %s31 = sphi 0, %s31
      %s33 = sphi 0, %s31
      %s34 = sphi 0, %s33
      %s48 = sphi 0, %s34
      %s54 = sphi 0, %s56
      %s57 = sphi 0, %s54
      %s58 = sphi 0, %s57
      %s74 = sphi 0, %s58
      %s80 = sphi 0, %s82
      %s83 = sphi 0, %s80
      %s84 = sphi 0, %s83
      %s100 = sphi 0, %s84
      %s106 = sphi 0, %s108
      %s109 = sphi 0, %s106
      %s110 = sphi 0, %s109
      %s126 = sphi 0, %s110
      %s132 = sphi 0, %s134
      %s135 = sphi 0, %s132
      %s136 = sphi 0, %s135
      %s152 = sphi 0, %s136
      %s158 = sphi 0, %s160
      %s161 = sphi 0, %s158
      %s162 = sphi 0, %s161
      %s178 = sphi 0, %s162
      %s184 = sphi 0, %s186
      %s187 = sphi 0, %s184
      %s188 = sphi 0, %s187
      %s204 = sphi 0, %s188
      %s210 = sphi 0, %s212
      %s213 = sphi 0, %s210
      %s214 = sphi 0, %s213
      %s230 = sphi 0, %s214
      %s236 = sphi 0, %s238
      %s239 = sphi 0, %s236
      %s240 = sphi 0, %s239
      %s256 = sphi 0, %s240
      %s262 = sphi 0, %s264
      %s265 = sphi 0, %s262
      %s266 = sphi 0, %s265
      %s282 = sphi 0, %s266
      %s288 = sphi 0, %s290
      %s291 = sphi 0, %s288
      %s292 = sphi 0, %s291
      %s308 = sphi 0, %s292
      %s314 = sphi 0, %s316
      %s317 = sphi 0, %s314
      %s318 = sphi 0, %s317
      %s334 = sphi 0, %s318
      %s340 = sphi 0, %s342
      %s343 = sphi 0, %s340
      %s344 = sphi 0, %s343
      %s360 = sphi 0, %s344
      %s364 = sphi 0, %s364
      %s366 = sphi 0, %s364
      %s367 = sphi 0, %s366
      %s381 = sphi 0, %s367
      %s385 = sphi 0, %s385
      %s387 = sphi 0, %s385
      %s388 = sphi 0, %s387
      %s402 = sphi 0, %s388
      %s406 = sphi 0, %s406
      %s408 = sphi 0, %s406
      %s409 = sphi 0, %s408
      %s423 = sphi 0, %s409
    $region4: #{tpu_custom_call.1} parent=1 // loop_header_branch
      %26 = sbr.rel (%p24) target = $region8
    $region5: #{tpu_custom_call.1} parent=1 // loop_body
      %s28 = ssub.s32 %s23, 1
      %s29 = ssub.s32 %s23, 2
      %s30 = sadd.s32 %s23, 1
      %s32 = sadd.s32 %s31, 1
      %p35 = scmp.eq.s32.totalorder %s23, 1
      %p36 = scmp.ne.s32.totalorder %s31, %s33
      %p37 = scmp.eq.s32.totalorder %s23, 0
      %p38 = por %p36, %p37
      %p39 = scmp.ne.s32.totalorder %s31, %s33
      %p40 = scmp.eq.s32.totalorder %s28, 1
      %p41 = por %p39, %p40
      %p42 = scmp.ne.s32.totalorder %s33, %s34
      %p43 = scmp.eq.s32.totalorder %s28, 0
      %p44 = por %p42, %p43
      %p45 = scmp.ne.s32.totalorder %s33, %s34
      %p46 = scmp.eq.s32.totalorder %s29, 1
      %p47 = por %p45, %p46
      %p49 = scmp.ne.s32.totalorder %s34, %s48
      %p50 = scmp.eq.s32.totalorder %s29, 0
      %p51 = por %p49, %p50
      %s52 = ssub.s32 %s23, %s30
      %p53 = scmp.eq.s32.totalorder %s52, 0
      %s55 = sadd.s32 %s54, 1
      %s56 = scalar_select %p53, %s54, %s55
      %p59 = pneg %p53
      %p60 = scmp.eq.s32.totalorder %s23, 1
      %p61 = por %p59, %p60
      %p62 = scmp.ne.s32.totalorder %s54, %s57
      %p63 = scmp.eq.s32.totalorder %s23, 0
      %p64 = por %p62, %p63
      %p65 = scmp.ne.s32.totalorder %s54, %s57
      %p66 = scmp.eq.s32.totalorder %s28, 1
      %p67 = por %p65, %p66
      %p68 = scmp.ne.s32.totalorder %s57, %s58
      %p69 = scmp.eq.s32.totalorder %s28, 0
      %p70 = por %p68, %p69
      %p71 = scmp.ne.s32.totalorder %s57, %s58
      %p72 = scmp.eq.s32.totalorder %s29, 1
      %p73 = por %p71, %p72
      %p75 = scmp.ne.s32.totalorder %s58, %s74
      %p76 = scmp.eq.s32.totalorder %s29, 0
      %p77 = por %p75, %p76
      %s78 = ssub.s32 %s23, %s30
      %p79 = scmp.eq.s32.totalorder %s78, 0
      %s81 = sadd.s32 %s80, 1
      %s82 = scalar_select %p79, %s80, %s81
      %p85 = pneg %p79
      %p86 = scmp.eq.s32.totalorder %s23, 1
      %p87 = por %p85, %p86
      %p88 = scmp.ne.s32.totalorder %s80, %s83
      %p89 = scmp.eq.s32.totalorder %s23, 0
      %p90 = por %p88, %p89
      %p91 = scmp.ne.s32.totalorder %s80, %s83
      %p92 = scmp.eq.s32.totalorder %s28, 1
      %p93 = por %p91, %p92
      %p94 = scmp.ne.s32.totalorder %s83, %s84
      %p95 = scmp.eq.s32.totalorder %s28, 0
      %p96 = por %p94, %p95
      %p97 = scmp.ne.s32.totalorder %s83, %s84
      %p98 = scmp.eq.s32.totalorder %s29, 1
      %p99 = por %p97, %p98
      %p101 = scmp.ne.s32.totalorder %s84, %s100
      %p102 = scmp.eq.s32.totalorder %s29, 0
      %p103 = por %p101, %p102
      %s104 = ssub.s32 %s23, %s30
      %p105 = scmp.eq.s32.totalorder %s104, 0
      %s107 = sadd.s32 %s106, 1
      %s108 = scalar_select %p105, %s106, %s107
      %p111 = pneg %p105
      %p112 = scmp.eq.s32.totalorder %s23, 1
      %p113 = por %p111, %p112
      %p114 = scmp.ne.s32.totalorder %s106, %s109
      %p115 = scmp.eq.s32.totalorder %s23, 0
      %p116 = por %p114, %p115
      %p117 = scmp.ne.s32.totalorder %s106, %s109
      %p118 = scmp.eq.s32.totalorder %s28, 1
      %p119 = por %p117, %p118
      %p120 = scmp.ne.s32.totalorder %s109, %s110
      %p121 = scmp.eq.s32.totalorder %s28, 0
      %p122 = por %p120, %p121
      %p123 = scmp.ne.s32.totalorder %s109, %s110
      %p124 = scmp.eq.s32.totalorder %s29, 1
      %p125 = por %p123, %p124
      %p127 = scmp.ne.s32.totalorder %s110, %s126
      %p128 = scmp.eq.s32.totalorder %s29, 0
      %p129 = por %p127, %p128
      %s130 = ssub.s32 %s23, %s30
      %p131 = scmp.eq.s32.totalorder %s130, 0
      %s133 = sadd.s32 %s132, 1
      %s134 = scalar_select %p131, %s132, %s133
      %p137 = pneg %p131
      %p138 = scmp.eq.s32.totalorder %s23, 1
      %p139 = por %p137, %p138
      %p140 = scmp.ne.s32.totalorder %s132, %s135
      %p141 = scmp.eq.s32.totalorder %s23, 0
      %p142 = por %p140, %p141
      %p143 = scmp.ne.s32.totalorder %s132, %s135
      %p144 = scmp.eq.s32.totalorder %s28, 1
      %p145 = por %p143, %p144
      %p146 = scmp.ne.s32.totalorder %s135, %s136
      %p147 = scmp.eq.s32.totalorder %s28, 0
      %p148 = por %p146, %p147
      %p149 = scmp.ne.s32.totalorder %s135, %s136
      %p150 = scmp.eq.s32.totalorder %s29, 1
      %p151 = por %p149, %p150
      %p153 = scmp.ne.s32.totalorder %s136, %s152
      %p154 = scmp.eq.s32.totalorder %s29, 0
      %p155 = por %p153, %p154
      %s156 = ssub.s32 %s23, %s30
      %p157 = scmp.eq.s32.totalorder %s156, 0
      %s159 = sadd.s32 %s158, 1
      %s160 = scalar_select %p157, %s158, %s159
      %p163 = pneg %p157
      %p164 = scmp.eq.s32.totalorder %s23, 1
      %p165 = por %p163, %p164
      %p166 = scmp.ne.s32.totalorder %s158, %s161
      %p167 = scmp.eq.s32.totalorder %s23, 0
      %p168 = por %p166, %p167
      %p169 = scmp.ne.s32.totalorder %s158, %s161
      %p170 = scmp.eq.s32.totalorder %s28, 1
      %p171 = por %p169, %p170
      %p172 = scmp.ne.s32.totalorder %s161, %s162
      %p173 = scmp.eq.s32.totalorder %s28, 0
      %p174 = por %p172, %p173
      %p175 = scmp.ne.s32.totalorder %s161, %s162
      %p176 = scmp.eq.s32.totalorder %s29, 1
      %p177 = por %p175, %p176
      %p179 = scmp.ne.s32.totalorder %s162, %s178
      %p180 = scmp.eq.s32.totalorder %s29, 0
      %p181 = por %p179, %p180
      %s182 = ssub.s32 %s23, %s30
      %p183 = scmp.eq.s32.totalorder %s182, 0
      %s185 = sadd.s32 %s184, 1
      %s186 = scalar_select %p183, %s184, %s185
      %p189 = pneg %p183
      %p190 = scmp.eq.s32.totalorder %s23, 1
      %p191 = por %p189, %p190
      %p192 = scmp.ne.s32.totalorder %s184, %s187
      %p193 = scmp.eq.s32.totalorder %s23, 0
      %p194 = por %p192, %p193
      %p195 = scmp.ne.s32.totalorder %s184, %s187
      %p196 = scmp.eq.s32.totalorder %s28, 1
      %p197 = por %p195, %p196
      %p198 = scmp.ne.s32.totalorder %s187, %s188
      %p199 = scmp.eq.s32.totalorder %s28, 0
      %p200 = por %p198, %p199
      %p201 = scmp.ne.s32.totalorder %s187, %s188
      %p202 = scmp.eq.s32.totalorder %s29, 1
      %p203 = por %p201, %p202
      %p205 = scmp.ne.s32.totalorder %s188, %s204
      %p206 = scmp.eq.s32.totalorder %s29, 0
      %p207 = por %p205, %p206
      %s208 = ssub.s32 %s23, %s30
      %p209 = scmp.eq.s32.totalorder %s208, 0
      %s211 = sadd.s32 %s210, 1
      %s212 = scalar_select %p209, %s210, %s211
      %p215 = pneg %p209
      %p216 = scmp.eq.s32.totalorder %s23, 1
      %p217 = por %p215, %p216
      %p218 = scmp.ne.s32.totalorder %s210, %s213
      %p219 = scmp.eq.s32.totalorder %s23, 0
      %p220 = por %p218, %p219
      %p221 = scmp.ne.s32.totalorder %s210, %s213
      %p222 = scmp.eq.s32.totalorder %s28, 1
      %p223 = por %p221, %p222
      %p224 = scmp.ne.s32.totalorder %s213, %s214
      %p225 = scmp.eq.s32.totalorder %s28, 0
      %p226 = por %p224, %p225
      %p227 = scmp.ne.s32.totalorder %s213, %s214
      %p228 = scmp.eq.s32.totalorder %s29, 1
      %p229 = por %p227, %p228
      %p231 = scmp.ne.s32.totalorder %s214, %s230
      %p232 = scmp.eq.s32.totalorder %s29, 0
      %p233 = por %p231, %p232
      %s234 = ssub.s32 %s23, %s30
      %p235 = scmp.eq.s32.totalorder %s234, 0
      %s237 = sadd.s32 %s236, 1
      %s238 = scalar_select %p235, %s236, %s237
      %p241 = pneg %p235
      %p242 = scmp.eq.s32.totalorder %s23, 1
      %p243 = por %p241, %p242
      %p244 = scmp.ne.s32.totalorder %s236, %s239
      %p245 = scmp.eq.s32.totalorder %s23, 0
      %p246 = por %p244, %p245
      %p247 = scmp.ne.s32.totalorder %s236, %s239
      %p248 = scmp.eq.s32.totalorder %s28, 1
      %p249 = por %p247, %p248
      %p250 = scmp.ne.s32.totalorder %s239, %s240
      %p251 = scmp.eq.s32.totalorder %s28, 0
      %p252 = por %p250, %p251
      %p253 = scmp.ne.s32.totalorder %s239, %s240
      %p254 = scmp.eq.s32.totalorder %s29, 1
      %p255 = por %p253, %p254
      %p257 = scmp.ne.s32.totalorder %s240, %s256
      %p258 = scmp.eq.s32.totalorder %s29, 0
      %p259 = por %p257, %p258
      %s260 = ssub.s32 %s23, %s30
      %p261 = scmp.eq.s32.totalorder %s260, 0
      %s263 = sadd.s32 %s262, 1
      %s264 = scalar_select %p261, %s262, %s263
      %p267 = pneg %p261
      %p268 = scmp.eq.s32.totalorder %s23, 1
      %p269 = por %p267, %p268
      %p270 = scmp.ne.s32.totalorder %s262, %s265
      %p271 = scmp.eq.s32.totalorder %s23, 0
      %p272 = por %p270, %p271
      %p273 = scmp.ne.s32.totalorder %s262, %s265
      %p274 = scmp.eq.s32.totalorder %s28, 1
      %p275 = por %p273, %p274
      %p276 = scmp.ne.s32.totalorder %s265, %s266
      %p277 = scmp.eq.s32.totalorder %s28, 0
      %p278 = por %p276, %p277
      %p279 = scmp.ne.s32.totalorder %s265, %s266
      %p280 = scmp.eq.s32.totalorder %s29, 1
      %p281 = por %p279, %p280
      %p283 = scmp.ne.s32.totalorder %s266, %s282
      %p284 = scmp.eq.s32.totalorder %s29, 0
      %p285 = por %p283, %p284
      %s286 = ssub.s32 %s23, %s30
      %p287 = scmp.eq.s32.totalorder %s286, 0
      %s289 = sadd.s32 %s288, 1
      %s290 = scalar_select %p287, %s288, %s289
      %p293 = pneg %p287
      %p294 = scmp.eq.s32.totalorder %s23, 1
      %p295 = por %p293, %p294
      %p296 = scmp.ne.s32.totalorder %s288, %s291
      %p297 = scmp.eq.s32.totalorder %s23, 0
      %p298 = por %p296, %p297
      %p299 = scmp.ne.s32.totalorder %s288, %s291
      %p300 = scmp.eq.s32.totalorder %s28, 1
      %p301 = por %p299, %p300
      %p302 = scmp.ne.s32.totalorder %s291, %s292
      %p303 = scmp.eq.s32.totalorder %s28, 0
      %p304 = por %p302, %p303
      %p305 = scmp.ne.s32.totalorder %s291, %s292
      %p306 = scmp.eq.s32.totalorder %s29, 1
      %p307 = por %p305, %p306
      %p309 = scmp.ne.s32.totalorder %s292, %s308
      %p310 = scmp.eq.s32.totalorder %s29, 0
      %p311 = por %p309, %p310
      %s312 = ssub.s32 %s23, %s30
      %p313 = scmp.eq.s32.totalorder %s312, 0
      %s315 = sadd.s32 %s314, 1
      %s316 = scalar_select %p313, %s314, %s315
      %p319 = pneg %p313
      %p320 = scmp.eq.s32.totalorder %s23, 1
      %p321 = por %p319, %p320
      %p322 = scmp.ne.s32.totalorder %s314, %s317
      %p323 = scmp.eq.s32.totalorder %s23, 0
      %p324 = por %p322, %p323
      %p325 = scmp.ne.s32.totalorder %s314, %s317
      %p326 = scmp.eq.s32.totalorder %s28, 1
      %p327 = por %p325, %p326
      %p328 = scmp.ne.s32.totalorder %s317, %s318
      %p329 = scmp.eq.s32.totalorder %s28, 0
      %p330 = por %p328, %p329
      %p331 = scmp.ne.s32.totalorder %s317, %s318
      %p332 = scmp.eq.s32.totalorder %s29, 1
      %p333 = por %p331, %p332
      %p335 = scmp.ne.s32.totalorder %s318, %s334
      %p336 = scmp.eq.s32.totalorder %s29, 0
      %p337 = por %p335, %p336
      %s338 = ssub.s32 %s23, %s30
      %p339 = scmp.eq.s32.totalorder %s338, 0
      %s341 = sadd.s32 %s340, 1
      %s342 = scalar_select %p339, %s340, %s341
      %p345 = pneg %p339
      %p346 = scmp.eq.s32.totalorder %s23, 1
      %p347 = por %p345, %p346
      %p348 = scmp.ne.s32.totalorder %s340, %s343
      %p349 = scmp.eq.s32.totalorder %s23, 0
      %p350 = por %p348, %p349
      %p351 = scmp.ne.s32.totalorder %s340, %s343
      %p352 = scmp.eq.s32.totalorder %s28, 1
      %p353 = por %p351, %p352
      %p354 = scmp.ne.s32.totalorder %s343, %s344
      %p355 = scmp.eq.s32.totalorder %s28, 0
      %p356 = por %p354, %p355
      %p357 = scmp.ne.s32.totalorder %s343, %s344
      %p358 = scmp.eq.s32.totalorder %s29, 1
      %p359 = por %p357, %p358
      %p361 = scmp.ne.s32.totalorder %s344, %s360
      %p362 = scmp.eq.s32.totalorder %s29, 0
      %p363 = por %p361, %p362
      %s365 = sadd.s32 %s364, 1
      %p368 = scmp.eq.s32.totalorder %s23, 1
      %p369 = scmp.ne.s32.totalorder %s364, %s366
      %p370 = scmp.eq.s32.totalorder %s23, 0
      %p371 = por %p369, %p370
      %p372 = scmp.ne.s32.totalorder %s364, %s366
      %p373 = scmp.eq.s32.totalorder %s28, 1
      %p374 = por %p372, %p373
      %p375 = scmp.ne.s32.totalorder %s366, %s367
      %p376 = scmp.eq.s32.totalorder %s28, 0
      %p377 = por %p375, %p376
      %p378 = scmp.ne.s32.totalorder %s366, %s367
      %p379 = scmp.eq.s32.totalorder %s29, 1
      %p380 = por %p378, %p379
      %p382 = scmp.ne.s32.totalorder %s367, %s381
      %p383 = scmp.eq.s32.totalorder %s29, 0
      %p384 = por %p382, %p383
      %s386 = sadd.s32 %s385, 1
      %p389 = scmp.eq.s32.totalorder %s23, 1
      %p390 = scmp.ne.s32.totalorder %s385, %s387
      %p391 = scmp.eq.s32.totalorder %s23, 0
      %p392 = por %p390, %p391
      %p393 = scmp.ne.s32.totalorder %s385, %s387
      %p394 = scmp.eq.s32.totalorder %s28, 1
      %p395 = por %p393, %p394
      %p396 = scmp.ne.s32.totalorder %s387, %s388
      %p397 = scmp.eq.s32.totalorder %s28, 0
      %p398 = por %p396, %p397
      %p399 = scmp.ne.s32.totalorder %s387, %s388
      %p400 = scmp.eq.s32.totalorder %s29, 1
      %p401 = por %p399, %p400
      %p403 = scmp.ne.s32.totalorder %s388, %s402
      %p404 = scmp.eq.s32.totalorder %s29, 0
      %p405 = por %p403, %p404
      %s407 = sadd.s32 %s406, 1
      %p410 = scmp.eq.s32.totalorder %s23, 1
      %p411 = scmp.ne.s32.totalorder %s406, %s408
      %p412 = scmp.eq.s32.totalorder %s23, 0
      %p413 = por %p411, %p412
      %p414 = scmp.ne.s32.totalorder %s406, %s408
      %p415 = scmp.eq.s32.totalorder %s28, 1
      %p416 = por %p414, %p415
      %p417 = scmp.ne.s32.totalorder %s408, %s409
      %p418 = scmp.eq.s32.totalorder %s28, 0
      %p419 = por %p417, %p418
      %p420 = scmp.ne.s32.totalorder %s408, %s409
      %p421 = scmp.eq.s32.totalorder %s29, 1
      %p422 = por %p420, %p421
      %p424 = scmp.ne.s32.totalorder %s409, %s423
      %p425 = scmp.eq.s32.totalorder %s29, 0
      %p426 = por %p424, %p425
      %p427 = scmp.le.s32.totalorder 1, %s23
      %p428 = scmp.lt.s32.totalorder %s23, 3
      %p429 = pnand %p427, %p428
      %p430 = pneg %p429
      // Predicated region
      $region9: #{tpu_custom_call.1} parent=5 // pred_check
        _
      $region10: #{tpu_custom_call.1} parent=5 // pred_check_branch
        %432 = sbr.rel (%p429) target = $region12
      $region11: #{tpu_custom_call.1} parent=5 // pred_region
        %s433 = ssub.s32 %s23, 1
        // Predicated region
        $region13: #{tpu_custom_call.1} parent=11 // pred_check
          %p434 = pneg %p44
        $region14: #{tpu_custom_call.1} parent=11 // pred_check_branch
          %436 = sbr.rel (%p434) target = $region16
        $region15: #{tpu_custom_call.1} parent=11 // pred_region
          %s438 = ssub.s32 256, 256
          %439 = vsyncadd [#allocation4], %s438
          %s440 = sshll.u32 [#allocation3], 4
          %s441 = int_to_ptr.vmem [resolvable:$true] %s440
          %446 = dma.hbm_to_vmem [thread:$0]  %s0, 256, %s441, [#allocation4], 128, 128, 8
        $region16: #{tpu_custom_call.1} parent=11 // pred_fallthru
          _
        // Predicated region
        $region17: #{tpu_custom_call.1} parent=11 // pred_check
          %p447 = pneg %p377
        $region18: #{tpu_custom_call.1} parent=11 // pred_check_branch
          %449 = sbr.rel (%p447) target = $region20
        $region19: #{tpu_custom_call.1} parent=11 // pred_region
          _
        $region20: #{tpu_custom_call.1} parent=11 // pred_fallthru
          _
        // Predicated region
        $region21: #{tpu_custom_call.1} parent=11 // pred_check
          %p450 = pneg %p398
        $region22: #{tpu_custom_call.1} parent=11 // pred_check_branch
          %452 = sbr.rel (%p450) target = $region24
        $region23: #{tpu_custom_call.1} parent=11 // pred_region
          _
        $region24: #{tpu_custom_call.1} parent=11 // pred_fallthru
          _
      $region12: #{tpu_custom_call.1} parent=5 // pred_fallthru
        _
      %p453 = scmp.lt.s32.totalorder %s23, 2
      // Predicated region
      $region25: #{tpu_custom_call.1} parent=5 // pred_check
        %p454 = pneg %p453
      $region26: #{tpu_custom_call.1} parent=5 // pred_check_branch
        %456 = sbr.rel (%p454) target = $region28
      $region27: #{tpu_custom_call.1} parent=5 // pred_region
        // Predicated region
        $region29: #{tpu_custom_call.1} parent=27 // pred_check
          %p457 = pneg %p64
        $region30: #{tpu_custom_call.1} parent=27 // pred_check_branch
          %459 = sbr.rel (%p457) target = $region32
        $region31: #{tpu_custom_call.1} parent=27 // pred_region
          %p460 = scmp.lt.s32.totalorder %s23, 1
          %s461 = scalar_select %p460, %s23, 1
          %s462 = scalar_lea.vmem %s1, %s461
        $region32: #{tpu_custom_call.1} parent=27 // pred_fallthru
          _
        // Predicated region
        $region33: #{tpu_custom_call.1} parent=27 // pred_check
          %p463 = pneg %p90
        $region34: #{tpu_custom_call.1} parent=27 // pred_check_branch
          %465 = sbr.rel (%p463) target = $region36
        $region35: #{tpu_custom_call.1} parent=27 // pred_region
          %p466 = scmp.lt.s32.totalorder %s23, 1
          %s467 = scalar_select %p466, %s23, 1
          %s468 = scalar_lea.vmem %s2, %s467
        $region36: #{tpu_custom_call.1} parent=27 // pred_fallthru
          _
        // Predicated region
        $region37: #{tpu_custom_call.1} parent=27 // pred_check
          %p469 = pneg %p116
        $region38: #{tpu_custom_call.1} parent=27 // pred_check_branch
          %471 = sbr.rel (%p469) target = $region40
        $region39: #{tpu_custom_call.1} parent=27 // pred_region
          %p472 = scmp.lt.s32.totalorder %s23, 1
          %s473 = scalar_select %p472, %s23, 1
          %s474 = smul.addr %s473, 4
          %s475 = smul.addr %s474, 4
          %s476 = scalar_lea.vmem %s3, %s475
        $region40: #{tpu_custom_call.1} parent=27 // pred_fallthru
          _
        // Predicated region
        $region41: #{tpu_custom_call.1} parent=27 // pred_check
          %p477 = pneg %p142
        $region42: #{tpu_custom_call.1} parent=27 // pred_check_branch
          %479 = sbr.rel (%p477) target = $region44
        $region43: #{tpu_custom_call.1} parent=27 // pred_region
          %p480 = scmp.lt.s32.totalorder %s23, 1
          %s481 = scalar_select %p480, %s23, 1
          %s482 = scalar_lea.vmem %s4, %s481
        $region44: #{tpu_custom_call.1} parent=27 // pred_fallthru
          _
        // Predicated region
        $region45: #{tpu_custom_call.1} parent=27 // pred_check
          %p483 = pneg %p168
        $region46: #{tpu_custom_call.1} parent=27 // pred_check_branch
          %485 = sbr.rel (%p483) target = $region48
        $region47: #{tpu_custom_call.1} parent=27 // pred_region
          %p486 = scmp.lt.s32.totalorder %s23, 1
          %s487 = scalar_select %p486, %s23, 1
          %s488 = smul.addr %s487, 4
          %s489 = smul.addr %s488, 4
          %s490 = scalar_lea.vmem %s5, %s489
        $region48: #{tpu_custom_call.1} parent=27 // pred_fallthru
          _
        // Predicated region
        $region49: #{tpu_custom_call.1} parent=27 // pred_check
          %p491 = pneg %p194
        $region50: #{tpu_custom_call.1} parent=27 // pred_check_branch
          %493 = sbr.rel (%p491) target = $region52
        $region51: #{tpu_custom_call.1} parent=27 // pred_region
          %p494 = scmp.lt.s32.totalorder %s23, 1
          %s495 = scalar_select %p494, %s23, 1
          %s496 = scalar_lea.vmem %s6, %s495
        $region52: #{tpu_custom_call.1} parent=27 // pred_fallthru
          _
        // Predicated region
        $region53: #{tpu_custom_call.1} parent=27 // pred_check
          %p497 = pneg %p220
        $region54: #{tpu_custom_call.1} parent=27 // pred_check_branch
          %499 = sbr.rel (%p497) target = $region56
        $region55: #{tpu_custom_call.1} parent=27 // pred_region
          %p500 = scmp.lt.s32.totalorder %s23, 1
          %s501 = scalar_select %p500, %s23, 1
          %s502 = scalar_lea.vmem %s7, %s501
        $region56: #{tpu_custom_call.1} parent=27 // pred_fallthru
          _
        // Predicated region
        $region57: #{tpu_custom_call.1} parent=27 // pred_check
          %p503 = pneg %p246
        $region58: #{tpu_custom_call.1} parent=27 // pred_check_branch
          %505 = sbr.rel (%p503) target = $region60
        $region59: #{tpu_custom_call.1} parent=27 // pred_region
          %p506 = scmp.lt.s32.totalorder %s23, 1
          %s507 = scalar_select %p506, %s23, 1
          %s508 = scalar_lea.vmem %s8, %s507
        $region60: #{tpu_custom_call.1} parent=27 // pred_fallthru
          _
        // Predicated region
        $region61: #{tpu_custom_call.1} parent=27 // pred_check
          %p509 = pneg %p272
        $region62: #{tpu_custom_call.1} parent=27 // pred_check_branch
          %511 = sbr.rel (%p509) target = $region64
        $region63: #{tpu_custom_call.1} parent=27 // pred_region
          %p512 = scmp.lt.s32.totalorder %s23, 1
          %s513 = scalar_select %p512, %s23, 1
          %s514 = smul.addr %s513, 4
          %s515 = smul.addr %s514, 4
          %s516 = scalar_lea.vmem %s9, %s515
        $region64: #{tpu_custom_call.1} parent=27 // pred_fallthru
          _
        // Predicated region
        $region65: #{tpu_custom_call.1} parent=27 // pred_check
          %p517 = pneg %p298
        $region66: #{tpu_custom_call.1} parent=27 // pred_check_branch
          %519 = sbr.rel (%p517) target = $region68
        $region67: #{tpu_custom_call.1} parent=27 // pred_region
          %p520 = scmp.lt.s32.totalorder %s23, 1
          %s521 = scalar_select %p520, %s23, 1
          %s522 = scalar_lea.vmem %s10, %s521
        $region68: #{tpu_custom_call.1} parent=27 // pred_fallthru
          _
        // Predicated region
        $region69: #{tpu_custom_call.1} parent=27 // pred_check
          %p523 = pneg %p324
        $region70: #{tpu_custom_call.1} parent=27 // pred_check_branch
          %525 = sbr.rel (%p523) target = $region72
        $region71: #{tpu_custom_call.1} parent=27 // pred_region
          %p526 = scmp.lt.s32.totalorder %s23, 1
          %s527 = scalar_select %p526, %s23, 1
          %s528 = smul.addr %s527, 16
          %s529 = smul.addr %s528, 4
          %s530 = scalar_lea.vmem %s11, %s529
        $region72: #{tpu_custom_call.1} parent=27 // pred_fallthru
          _
        // Predicated region
        $region73: #{tpu_custom_call.1} parent=27 // pred_check
          %p531 = pneg %p350
        $region74: #{tpu_custom_call.1} parent=27 // pred_check_branch
          %533 = sbr.rel (%p531) target = $region76
        $region75: #{tpu_custom_call.1} parent=27 // pred_region
          %p534 = scmp.lt.s32.totalorder %s23, 1
          %s535 = scalar_select %p534, %s23, 1
          %s536 = scalar_lea.vmem %s12, %s535
        $region76: #{tpu_custom_call.1} parent=27 // pred_fallthru
          _
      $region28: #{tpu_custom_call.1} parent=5 // pred_fallthru
        _
      %p537 = scmp.le.s32.totalorder 1, %s23
      %p538 = scmp.lt.s32.totalorder %s23, 3
      %p539 = pnand %p537, %p538
      %p540 = pneg %p539
      // Predicated region
      $region77: #{tpu_custom_call.1} parent=5 // pred_check
        _
      $region78: #{tpu_custom_call.1} parent=5 // pred_check_branch
        %542 = sbr.rel (%p539) target = $region80
      $region79: #{tpu_custom_call.1} parent=5 // pred_region
        %s543 = ssub.s32 %s23, 1
        // Predicated region
        $region81: #{tpu_custom_call.1} parent=79 // pred_check
          %p544 = pneg %p44
        $region82: #{tpu_custom_call.1} parent=79 // pred_check_branch
          %546 = sbr.rel (%p544) target = $region84
        $region83: #{tpu_custom_call.1} parent=79 // pred_region
          %547 = dma.done [#allocation4], 256
        $region84: #{tpu_custom_call.1} parent=79 // pred_fallthru
          _
        %p548 = pneg %p44
        %p549 = pneg %p41
        %p550 = scmp.lt.s32.totalorder %s28, 1
        %s551 = scalar_select %p550, %s28, 1
        %s552 = scalar_lea.vmem %s1, %s551
        %p553 = pneg %p70
        %p554 = pneg %p67
        %p555 = scmp.lt.s32.totalorder %s28, 1
        %s556 = scalar_select %p555, %s28, 1
        %s557 = scalar_lea.vmem %s2, %s556
        %p558 = pneg %p96
        %p559 = pneg %p93
        %p560 = scmp.lt.s32.totalorder %s28, 1
        %s561 = scalar_select %p560, %s28, 1
        %s562 = smul.addr %s561, 4
        %s563 = smul.addr %s562, 4
        %s564 = scalar_lea.vmem %s3, %s563
        %p565 = pneg %p122
        %p566 = pneg %p119
        %p567 = scmp.lt.s32.totalorder %s28, 1
        %s568 = scalar_select %p567, %s28, 1
        %s569 = scalar_lea.vmem %s4, %s568
        %p570 = pneg %p148
        %p571 = pneg %p145
        %p572 = scmp.lt.s32.totalorder %s28, 1
        %s573 = scalar_select %p572, %s28, 1
        %s574 = smul.addr %s573, 4
        %s575 = smul.addr %s574, 4
        %s576 = scalar_lea.vmem %s5, %s575
        %p577 = pneg %p174
        %p578 = pneg %p171
        %p579 = scmp.lt.s32.totalorder %s28, 1
        %s580 = scalar_select %p579, %s28, 1
        %s581 = scalar_lea.vmem %s6, %s580
        %p582 = pneg %p200
        %p583 = pneg %p197
        %p584 = scmp.lt.s32.totalorder %s28, 1
        %s585 = scalar_select %p584, %s28, 1
        %s586 = scalar_lea.vmem %s7, %s585
        %p587 = pneg %p226
        %p588 = pneg %p223
        %p589 = scmp.lt.s32.totalorder %s28, 1
        %s590 = scalar_select %p589, %s28, 1
        %s591 = scalar_lea.vmem %s8, %s590
        %p592 = pneg %p252
        %p593 = pneg %p249
        %p594 = scmp.lt.s32.totalorder %s28, 1
        %s595 = scalar_select %p594, %s28, 1
        %s596 = smul.addr %s595, 4
        %s597 = smul.addr %s596, 4
        %s598 = scalar_lea.vmem %s9, %s597
        %p599 = pneg %p278
        %p600 = pneg %p275
        %p601 = scmp.lt.s32.totalorder %s28, 1
        %s602 = scalar_select %p601, %s28, 1
        %s603 = scalar_lea.vmem %s10, %s602
        %p604 = pneg %p304
        %p605 = pneg %p301
        %p606 = scmp.lt.s32.totalorder %s28, 1
        %s607 = scalar_select %p606, %s28, 1
        %s608 = smul.addr %s607, 16
        %s609 = smul.addr %s608, 4
        %s610 = scalar_lea.vmem %s11, %s609
        %p611 = pneg %p330
        %p612 = pneg %p327
        %p613 = scmp.lt.s32.totalorder %s28, 1
        %s614 = scalar_select %p613, %s28, 1
        %s615 = scalar_lea.vmem %s12, %s614
        %p616 = pneg %p356
        %p617 = pneg %p353
        %p618 = pneg %p377
        %p619 = pneg %p374
        %p620 = pneg %p398
        %p621 = pneg %p395
        %p622 = pneg %p419
        %p623 = pneg %p416
        %p624 = scmp.lt.s32.totalorder %s28, 1
        %s625 = scalar_select %p624, %s28, 1
        %s626 = scalar_lea.vmem %s1, %s625
        %p627 = scmp.lt.s32.totalorder %s28, 1
        %s628 = scalar_select %p627, %s28, 1
        %s629 = scalar_lea.vmem %s2, %s628
        %p630 = scmp.lt.s32.totalorder %s28, 1
        %s631 = scalar_select %p630, %s28, 1
        %s632 = smul.addr %s631, 4
        %s633 = smul.addr %s632, 4
        %s634 = scalar_lea.vmem %s3, %s633
        %p635 = scmp.lt.s32.totalorder %s28, 1
        %s636 = scalar_select %p635, %s28, 1
        %s637 = scalar_lea.vmem %s4, %s636
        %p638 = scmp.lt.s32.totalorder %s28, 1
        %s639 = scalar_select %p638, %s28, 1
        %s640 = smul.addr %s639, 4
        %s641 = smul.addr %s640, 4
        %s642 = scalar_lea.vmem %s5, %s641
        %p643 = scmp.lt.s32.totalorder %s28, 1
        %s644 = scalar_select %p643, %s28, 1
        %s645 = scalar_lea.vmem %s6, %s644
        %p646 = scmp.lt.s32.totalorder %s28, 1
        %s647 = scalar_select %p646, %s28, 1
        %s648 = scalar_lea.vmem %s7, %s647
        %p649 = scmp.lt.s32.totalorder %s28, 1
        %s650 = scalar_select %p649, %s28, 1
        %s651 = scalar_lea.vmem %s8, %s650
        %p652 = scmp.lt.s32.totalorder %s28, 1
        %s653 = scalar_select %p652, %s28, 1
        %s654 = smul.addr %s653, 4
        %s655 = smul.addr %s654, 4
        %s656 = scalar_lea.vmem %s9, %s655
        %p657 = scmp.lt.s32.totalorder %s28, 1
        %s658 = scalar_select %p657, %s28, 1
        %s659 = scalar_lea.vmem %s10, %s658
        %p660 = scmp.lt.s32.totalorder %s28, 1
        %s661 = scalar_select %p660, %s28, 1
        %s662 = smul.addr %s661, 16
        %s663 = smul.addr %s662, 4
        %s664 = scalar_lea.vmem %s11, %s663
        %p665 = scmp.lt.s32.totalorder %s28, 1
        %s666 = scalar_select %p665, %s28, 1
        %s667 = scalar_lea.vmem %s12, %s666
        %p669 = scmp.eq.s32.totalorder %s28, 0
        // Predicated region
        $region85: #{tpu_custom_call.1} parent=79 // pred_check
          %p670 = pneg %p669
        $region86: #{tpu_custom_call.1} parent=79 // pred_check_branch
          %672 = sbr.rel (%p670) target = $region88
        $region87: #{tpu_custom_call.1} parent=79 // pred_region
          %v673 = vld [vmem:[#allocation3] sm:$0xff]
          %v674 = vld [vmem:[#allocation3 + $0x8] sm:$0xff]
          %vm675 = vcmask 261120
          %676 = vst.msk [vmem:[#allocation6] sm:$0xff] %vm675, %v673
          %677 = vst.msk [vmem:[#allocation6 + $0x8] sm:$0xff] %vm675, %v674
        $region88: #{tpu_custom_call.1} parent=79 // pred_fallthru
          _
        %v678 = vld [vmem:[%s634] sm:$0xf]
        %v679 = vld [vmem:[%s634 + $0x4] sm:$0xf]
        %v680 = vld [vmem:[%s634 + $0x8] sm:$0xf]
        %v681 = vld [vmem:[%s634 + $0xc] sm:$0xf]
        %v682 = vld [vmem:[%s637] sm:$0x1]
        %v683 = vld [vmem:[%s642] sm:$0xf]
        %v684 = vld [vmem:[%s642 + $0x4] sm:$0xf]
        %v685 = vld [vmem:[%s642 + $0x8] sm:$0xf]
        %v686 = vld [vmem:[%s642 + $0xc] sm:$0xf]
        %v687 = vld [vmem:[%s645] sm:$0x1]
        %v688 = vld [vmem:[%s656] sm:$0xf]
        %v689 = vld [vmem:[%s656 + $0x4] sm:$0xf]
        %v690 = vld [vmem:[%s656 + $0x8] sm:$0xf]
        %v691 = vld [vmem:[%s656 + $0xc] sm:$0xf]
        %v692 = vld [vmem:[%s659] sm:$0x1]
        %v693 = vld [vmem:[%s664] sm:$0xf]
        %v694 = vld [vmem:[%s664 + $0x4] sm:$0xf]
        %v695 = vld [vmem:[%s664 + $0x8] sm:$0xf]
        %v696 = vld [vmem:[%s664 + $0xc] sm:$0xf]
        %v697 = vld [vmem:[%s664 + $0x10] sm:$0xf]
        %v698 = vld [vmem:[%s664 + $0x14] sm:$0xf]
        %v699 = vld [vmem:[%s664 + $0x18] sm:$0xf]
        %v700 = vld [vmem:[%s664 + $0x1c] sm:$0xf]
        %v701 = vld [vmem:[%s664 + $0x20] sm:$0xf]
        %v702 = vld [vmem:[%s664 + $0x24] sm:$0xf]
        %v703 = vld [vmem:[%s664 + $0x28] sm:$0xf]
        %v704 = vld [vmem:[%s664 + $0x2c] sm:$0xf]
        %v705 = vld [vmem:[%s664 + $0x30] sm:$0xf]
        %v706 = vld [vmem:[%s664 + $0x34] sm:$0xf]
        %v707 = vld [vmem:[%s664 + $0x38] sm:$0xf]
        %v708 = vld [vmem:[%s664 + $0x3c] sm:$0xf]
        %v709 = vld [vmem:[%s667] sm:$0x1]
        %v710 = vld [vmem:[%s626] sm:$0x1]
        %v711 = vld [vmem:[%s629] sm:$0x1]
        %v712 = vld [vmem:[%s648] sm:$0x1]
        %v713 = vld [vmem:[%s651] sm:$0x1]
        %v714 = vld [vmem:[%s13] sm:$0x1]
        %v715 = vld [vmem:[%s14] sm:$0x1]
        %v716 = vlaneseq
        %v717 = vshrl.u32 %v716, 7
        %v718 = vlaneseq
        %v719 = vand.u32 %v718, 127
        %vm720 = vcmp.le.s32.totalorder %v719, %v717
        %v721 = vld [vmem:[#allocation6] sm:$0xff]
        %v722 = vld [vmem:[#allocation6 + $0x8] sm:$0xff]
        %vm723 = vcmask 261120
        %v724 = vsel %vm723, %v721, 0.0
        %725 = vadd.xlane.f32.xlu0 %v724
        %v726 = vpop.xlane.xlu0 %725
        %v727 = vsel %vm723, %v722, 0.0
        %728 = vadd.xlane.f32.xlu0 %v727
        %v729 = vpop.xlane.xlu0 %728
        %v730 = vrcp.pop 32.0
        %v731 = vmul.f32 %v726, %v730
        %v732 = vmul.f32 %v729, %v730
        %v733 = vsub.f32 %v721, %v731
        %v734 = vsub.f32 %v722, %v732
        %v735 = vmul.f32 %v733, %v733
        %v736 = vmul.f32 %v734, %v734
        %v737 = vsel %vm723, %v735, 0.0
        %738 = vadd.xlane.f32.xlu0 %v737
        %v739 = vpop.xlane.xlu0 %738
        %v740 = vsel %vm723, %v736, 0.0
        %741 = vadd.xlane.f32.xlu0 %v740
        %v742 = vpop.xlane.xlu0 %741
        %v743 = vmul.f32 %v739, %v730
        %v744 = vmul.f32 %v742, %v730
        %v745 = vadd.f32 %v743, 1e-05
        %v746 = vadd.f32 %v744, 1e-05
        %v747 = vrsqrt.pop %v745
        %v748 = vrsqrt.pop %v746
        %v749 = vmul.f32 %v733, %v747
        %v750 = vmul.f32 %v734, %v748
        %v752 = vlaneseq
        %v753 = vshrl.u32 %v752, 7
        %v754 = vsub.s32 0, %v753
        %v755 = vrot.slane %v710, %v754
        %v757 = vmul.f32 %v749, %v755
        %v758 = vmul.f32 %v750, %v755
        %v760 = vlaneseq
        %v761 = vshrl.u32 %v760, 7
        %v762 = vsub.s32 0, %v761
        %v763 = vrot.slane %v711, %v762
        %v765 = vadd.f32 %v757, %v763
        %v766 = vadd.f32 %v758, %v763
        %v767 = vpack.c.bf16 %v766, %v765
        %v769 = vlaneseq
        %v770 = vshrl.u32 %v769, 7
        %v771 = vsub.s32 0, %v770
        %v772 = vrot.slane %v682, %v771
        %v778 = vunpack.c.l.b16 %v678
        %v779 = vunpack.c.l.b16 %v679
        %v780 = vunpack.c.l.b16 %v680
        %v781 = vunpack.c.l.b16 %v681
        %v782 = vpack.c.b16 %v779, %v778
        %v783 = vpack.c.b16 %v781, %v780
        %v787 = vsel %vm723, %v767, 0
        %789 = vmatprep.subr.bf16.mxu0 0
        %790 = vmatpush1.bf16.msra.mxu0 0
        %791 = vmatprep.subr.bf16.mxu0 0
        %792 = vmatpush1.bf16.msra.mxu0 0
        %793 = vmatprep.subr.bf16.mxu0 0
        %794 = vmatpush1.bf16.msra.mxu0 0
        %795 = vmatprep.subr.bf16.mxu0 0
        %796 = vmatpush1.bf16.msra.mxu0 0
        %797 = vmatprep.subr.bf16.mxu0 0
        %798 = vmatpush1.bf16.msra.mxu0 0
        %799 = vmatprep.subr.bf16.mxu0 0
        %800 = vmatpush1.bf16.msra.mxu0 0
        %801 = vmatprep.subr.bf16.mxu0 0
        %802 = vmatpush1.bf16.msra.mxu0 %v783
        %803 = vmatprep.subr.bf16.mxu0 0
        %804 = vmatpush1.bf16.msra.mxu0 %v782
        %805 = vmatprep.subr.bf16.mxu0 0
        %806 = vmatpush2.bf16.msra.mxu0 0
        %807 = vmatprep.subr.bf16.mxu0 0
        %808 = vmatpush2.bf16.msra.mxu0 0
        %809 = vmatprep.subr.bf16.mxu0 0
        %810 = vmatpush2.bf16.msra.mxu0 0
        %811 = vmatprep.subr.bf16.mxu0 0
        %812 = vmatpush2.bf16.msra.mxu0 0
        %813 = vmatprep.subr.bf16.mxu0 0
        %814 = vmatpush2.bf16.msra.mxu0 0
        %815 = vmatprep.subr.bf16.mxu0 0
        %816 = vmatpush2.bf16.msra.mxu0 0
        %817 = vmatprep.subr.bf16.mxu0 0
        %818 = vmatpush2.bf16.msra.mxu0 0
        %819 = vmatprep.subr.bf16.mxu0 0
        %820 = vmatpush2.bf16.msra.mxu0 0
        %821 = vmatprep.mubr.bf16.mxu0 0
        %822 = vmatmul.mubr.bf16.gmra.mxu0 %v787
        %v823 = vpop.f32.mrf.mxu0
        %v824 = vadd.f32 %v772, %v823
        %v825 = vpop.f32.mrf.mxu0
        %v826 = vpop.f32.mrf.mxu0
        %v827 = vadd.f32 %v772, %v826
        %v828 = vpop.f32.mrf.mxu0
        %829 = vdwg.mxu0
        %v830 = vpack.c.bf16 %v824, %v824
        %832 = vrot.lane.b32.xlu0 %v830, 96
        %v833 = vpop.permute.xlu0 %832
        %vm834 = vcmask 64512
        %v836 = vsel %vm834, %v830, 0
        %v839 = vsel %vm834, %v833, 0
        %841 = vmatprep.subr.bf16.mxu0 0
        %842 = vmatpush1.bf16.xpose.msra.mxu0 0
        %843 = vmatprep.subr.bf16.mxu0 0
        %844 = vmatpush1.bf16.xpose.msra.mxu0 0
        %845 = vmatprep.subr.bf16.mxu0 0
        %846 = vmatpush1.bf16.xpose.msra.mxu0 0
        %847 = vmatprep.subr.bf16.mxu0 0
        %848 = vmatpush1.bf16.xpose.msra.mxu0 0
        %849 = vmatprep.subr.bf16.mxu0 0
        %850 = vmatpush1.bf16.xpose.msra.mxu0 0
        %851 = vmatprep.subr.bf16.mxu0 0
        %852 = vmatpush1.bf16.xpose.msra.mxu0 0
        %853 = vmatprep.subr.bf16.mxu0 0
        %854 = vmatpush1.bf16.xpose.msra.mxu0 0
        %855 = vmatprep.subr.bf16.mxu0 0
        %856 = vmatpush1.bf16.xpose.msra.mxu0 %v839
        %857 = vmatprep.subr.bf16.mxu0 0
        %858 = vmatpush2.bf16.xpose.msra.mxu0 0
        %859 = vmatprep.subr.bf16.mxu0 0
        %860 = vmatpush2.bf16.xpose.msra.mxu0 0
        %861 = vmatprep.subr.bf16.mxu0 0
        %862 = vmatpush2.bf16.xpose.msra.mxu0 0
        %863 = vmatprep.subr.bf16.mxu0 0
        %864 = vmatpush2.bf16.xpose.msra.mxu0 0
        %865 = vmatprep.subr.bf16.mxu0 0
        %866 = vmatpush2.bf16.xpose.msra.mxu0 0
        %867 = vmatprep.subr.bf16.mxu0 0
        %868 = vmatpush2.bf16.xpose.msra.mxu0 0
        %869 = vmatprep.subr.bf16.mxu0 0
        %870 = vmatpush2.bf16.xpose.msra.mxu0 0
        %871 = vmatprep.subr.bf16.mxu0 0
        %872 = vmatpush2.bf16.xpose.msra.mxu0 0
        %873 = vmatprep.mubr.bf16.mxu0 0
        %874 = vmatmul.mubr.bf16.gmra.mxu0 %v836
        %v875 = vpop.f32.mrf.mxu0
        %v876 = vadd.f32 0.0, %v875
        %v877 = vpop.f32.mrf.mxu0
        %v878 = vpop.f32.mrf.mxu0
        %v879 = vpop.f32.mrf.mxu0
        %880 = vdwg.mxu0
        %v881 = vmul.f32 %v876, 0.35355338
        %v882 = vsel %vm720, %v881, -1e+30
        %v883 = vsel %vm834, %v882, -inf
        %884 = vmax.xlane.f32.xlu0 %v883
        %v885 = vpop.xlane.xlu0 %884
        %v886 = vsub.f32 %v882, %v885
        %v887 = vmul.f32 %v886, 1.442695
        %v888 = vpow.pop %v887
        %v889 = vsel %vm834, %v888, 0.0
        %890 = vadd.xlane.f32.xlu0 %v889
        %v891 = vpop.xlane.xlu0 %890
        %v892 = vrcp.pop %v891
        %v893 = vmul.f32 %v888, %v892
        %v894 = vpack.c.bf16 %v893, %v893
        %895 = vrot.lane.b32.xlu0 %v830, 64
        %v896 = vpop.permute.xlu0 %895
        %v898 = vsel %vm834, %v894, 0
        %vm900 = vcmask 1043456
        %v902 = vsel %vm900, %v896, 0
        %904 = vmatprep.subr.bf16.mxu0 0
        %905 = vmatpush1.bf16.msra.mxu0 0
        %906 = vmatprep.subr.bf16.mxu0 0
        %907 = vmatpush1.bf16.msra.mxu0 0
        %908 = vmatprep.subr.bf16.mxu0 0
        %909 = vmatpush1.bf16.msra.mxu0 0
        %910 = vmatprep.subr.bf16.mxu0 0
        %911 = vmatpush1.bf16.msra.mxu0 0
        %912 = vmatprep.subr.bf16.mxu0 0
        %913 = vmatpush1.bf16.msra.mxu0 0
        %914 = vmatprep.subr.bf16.mxu0 0
        %915 = vmatpush1.bf16.msra.mxu0 0
        %916 = vmatprep.subr.bf16.mxu0 0
        %917 = vmatpush1.bf16.msra.mxu0 0
        %918 = vmatprep.subr.bf16.mxu0 0
        %919 = vmatpush1.bf16.msra.mxu0 %v902
        %920 = vmatprep.subr.bf16.mxu0 0
        %921 = vmatpush2.bf16.msra.mxu0 0
        %922 = vmatprep.subr.bf16.mxu0 0
        %923 = vmatpush2.bf16.msra.mxu0 0
        %924 = vmatprep.subr.bf16.mxu0 0
        %925 = vmatpush2.bf16.msra.mxu0 0
        %926 = vmatprep.subr.bf16.mxu0 0
        %927 = vmatpush2.bf16.msra.mxu0 0
        %928 = vmatprep.subr.bf16.mxu0 0
        %929 = vmatpush2.bf16.msra.mxu0 0
        %930 = vmatprep.subr.bf16.mxu0 0
        %931 = vmatpush2.bf16.msra.mxu0 0
        %932 = vmatprep.subr.bf16.mxu0 0
        %933 = vmatpush2.bf16.msra.mxu0 0
        %934 = vmatprep.subr.bf16.mxu0 0
        %935 = vmatpush2.bf16.msra.mxu0 0
        %936 = vmatprep.mubr.bf16.mxu0 0
        %937 = vmatmul.mubr.bf16.gmra.mxu0 %v898
        %v938 = vpop.f32.mrf.mxu0
        %v939 = vadd.f32 0.0, %v938
        %v940 = vpop.f32.mrf.mxu0
        %v941 = vpop.f32.mrf.mxu0
        %v942 = vpop.f32.mrf.mxu0
        %943 = vdwg.mxu0
        %v944 = vpack.c.bf16 %v939, %v939
        %vm945 = vcmask 60416
        %946 = vst.msk [vmem:[#allocation2] sm:$0xf] %vm945, %v944
        %947 = vrot.lane.b32.xlu0 %v830, 120
        %v948 = vpop.permute.xlu0 %947
        %949 = vrot.lane.b32.xlu0 %v830, 88
        %v950 = vpop.permute.xlu0 %949
        %v952 = vsel %vm834, %v948, 0
        %v955 = vsel %vm834, %v950, 0
        %957 = vmatprep.subr.bf16.mxu0 0
        %958 = vmatpush1.bf16.xpose.msra.mxu0 0
        %959 = vmatprep.subr.bf16.mxu0 0
        %960 = vmatpush1.bf16.xpose.msra.mxu0 0
        %961 = vmatprep.subr.bf16.mxu0 0
        %962 = vmatpush1.bf16.xpose.msra.mxu0 0
        %963 = vmatprep.subr.bf16.mxu0 0
        %964 = vmatpush1.bf16.xpose.msra.mxu0 0
        %965 = vmatprep.subr.bf16.mxu0 0
        %966 = vmatpush1.bf16.xpose.msra.mxu0 0
        %967 = vmatprep.subr.bf16.mxu0 0
        %968 = vmatpush1.bf16.xpose.msra.mxu0 0
        %969 = vmatprep.subr.bf16.mxu0 0
        %970 = vmatpush1.bf16.xpose.msra.mxu0 0
        %971 = vmatprep.subr.bf16.mxu0 0
        %972 = vmatpush1.bf16.xpose.msra.mxu0 %v955
        %973 = vmatprep.subr.bf16.mxu0 0
        %974 = vmatpush2.bf16.xpose.msra.mxu0 0
        %975 = vmatprep.subr.bf16.mxu0 0
        %976 = vmatpush2.bf16.xpose.msra.mxu0 0
        %977 = vmatprep.subr.bf16.mxu0 0
        %978 = vmatpush2.bf16.xpose.msra.mxu0 0
        %979 = vmatprep.subr.bf16.mxu0 0
        %980 = vmatpush2.bf16.xpose.msra.mxu0 0
        %981 = vmatprep.subr.bf16.mxu0 0
        %982 = vmatpush2.bf16.xpose.msra.mxu0 0
        %983 = vmatprep.subr.bf16.mxu0 0
        %984 = vmatpush2.bf16.xpose.msra.mxu0 0
        %985 = vmatprep.subr.bf16.mxu0 0
        %986 = vmatpush2.bf16.xpose.msra.mxu0 0
        %987 = vmatprep.subr.bf16.mxu0 0
        %988 = vmatpush2.bf16.xpose.msra.mxu0 0
        %989 = vmatprep.mubr.bf16.mxu0 0
        %990 = vmatmul.mubr.bf16.gmra.mxu0 %v952
        %v991 = vpop.f32.mrf.mxu0
        %v992 = vadd.f32 0.0, %v991
        %v993 = vpop.f32.mrf.mxu0
        %v994 = vpop.f32.mrf.mxu0
        %v995 = vpop.f32.mrf.mxu0
        %996 = vdwg.mxu0
        %v997 = vmul.f32 %v992, 0.35355338
        %v998 = vsel %vm720, %v997, -1e+30
        %v999 = vsel %vm834, %v998, -inf
        %1000 = vmax.xlane.f32.xlu0 %v999
        %v1001 = vpop.xlane.xlu0 %1000
        %v1002 = vsub.f32 %v998, %v1001
        %v1003 = vmul.f32 %v1002, 1.442695
        %v1004 = vpow.pop %v1003
        %v1005 = vsel %vm834, %v1004, 0.0
        %1006 = vadd.xlane.f32.xlu0 %v1005
        %v1007 = vpop.xlane.xlu0 %1006
        %v1008 = vrcp.pop %v1007
        %v1009 = vmul.f32 %v1004, %v1008
        %v1010 = vpack.c.bf16 %v1009, %v1009
        %1011 = vrot.lane.b32.xlu0 %v830, 56
        %v1012 = vpop.permute.xlu0 %1011
        %v1014 = vsel %vm834, %v1010, 0
        %v1017 = vsel %vm900, %v1012, 0
        %1019 = vmatprep.subr.bf16.mxu0 0
        %1020 = vmatpush1.bf16.msra.mxu0 0
        %1021 = vmatprep.subr.bf16.mxu0 0
        %1022 = vmatpush1.bf16.msra.mxu0 0
        %1023 = vmatprep.subr.bf16.mxu0 0
        %1024 = vmatpush1.bf16.msra.mxu0 0
        %1025 = vmatprep.subr.bf16.mxu0 0
        %1026 = vmatpush1.bf16.msra.mxu0 0
        %1027 = vmatprep.subr.bf16.mxu0 0
        %1028 = vmatpush1.bf16.msra.mxu0 0
        %1029 = vmatprep.subr.bf16.mxu0 0
        %1030 = vmatpush1.bf16.msra.mxu0 0
        %1031 = vmatprep.subr.bf16.mxu0 0
        %1032 = vmatpush1.bf16.msra.mxu0 0
        %1033 = vmatprep.subr.bf16.mxu0 0
        %1034 = vmatpush1.bf16.msra.mxu0 %v1017
        %1035 = vmatprep.subr.bf16.mxu0 0
        %1036 = vmatpush2.bf16.msra.mxu0 0
        %1037 = vmatprep.subr.bf16.mxu0 0
        %1038 = vmatpush2.bf16.msra.mxu0 0
        %1039 = vmatprep.subr.bf16.mxu0 0
        %1040 = vmatpush2.bf16.msra.mxu0 0
        %1041 = vmatprep.subr.bf16.mxu0 0
        %1042 = vmatpush2.bf16.msra.mxu0 0
        %1043 = vmatprep.subr.bf16.mxu0 0
        %1044 = vmatpush2.bf16.msra.mxu0 0
        %1045 = vmatprep.subr.bf16.mxu0 0
        %1046 = vmatpush2.bf16.msra.mxu0 0
        %1047 = vmatprep.subr.bf16.mxu0 0
        %1048 = vmatpush2.bf16.msra.mxu0 0
        %1049 = vmatprep.subr.bf16.mxu0 0
        %1050 = vmatpush2.bf16.msra.mxu0 0
        %1051 = vmatprep.mubr.bf16.mxu0 0
        %1052 = vmatmul.mubr.bf16.gmra.mxu0 %v1014
        %v1053 = vpop.f32.mrf.mxu0
        %v1054 = vadd.f32 0.0, %v1053
        %v1055 = vpop.f32.mrf.mxu0
        %v1056 = vpop.f32.mrf.mxu0
        %v1057 = vpop.f32.mrf.mxu0
        %1058 = vdwg.mxu0
        %v1059 = vpack.c.bf16 %v1054, %v1054
        %v1061 = vunpack.c.l.b16 %v1059
        %v1062 = vpack.c.b16 %v1061, %v1061
        %1063 = vrot.lane.b32.xlu0 %v1062, 8
        %v1064 = vpop.permute.xlu0 %1063
        %vm1066 = vcmask 126016
        %1067 = vst.msk [vmem:[#allocation2] sm:$0xf] %vm1066, %v1064
        %1068 = vrot.lane.b32.xlu0 %v830, 112
        %v1069 = vpop.permute.xlu0 %1068
        %1070 = vrot.lane.b32.xlu0 %v830, 80
        %v1071 = vpop.permute.xlu0 %1070
        %v1073 = vsel %vm834, %v1069, 0
        %v1076 = vsel %vm834, %v1071, 0
        %1078 = vmatprep.subr.bf16.mxu0 0
        %1079 = vmatpush1.bf16.xpose.msra.mxu0 0
        %1080 = vmatprep.subr.bf16.mxu0 0
        %1081 = vmatpush1.bf16.xpose.msra.mxu0 0
        %1082 = vmatprep.subr.bf16.mxu0 0
        %1083 = vmatpush1.bf16.xpose.msra.mxu0 0
        %1084 = vmatprep.subr.bf16.mxu0 0
        %1085 = vmatpush1.bf16.xpose.msra.mxu0 0
        %1086 = vmatprep.subr.bf16.mxu0 0
        %1087 = vmatpush1.bf16.xpose.msra.mxu0 0
        %1088 = vmatprep.subr.bf16.mxu0 0
        %1089 = vmatpush1.bf16.xpose.msra.mxu0 0
        %1090 = vmatprep.subr.bf16.mxu0 0
        %1091 = vmatpush1.bf16.xpose.msra.mxu0 0
        %1092 = vmatprep.subr.bf16.mxu0 0
        %1093 = vmatpush1.bf16.xpose.msra.mxu0 %v1076
        %1094 = vmatprep.subr.bf16.mxu0 0
        %1095 = vmatpush2.bf16.xpose.msra.mxu0 0
        %1096 = vmatprep.subr.bf16.mxu0 0
        %1097 = vmatpush2.bf16.xpose.msra.mxu0 0
        %1098 = vmatprep.subr.bf16.mxu0 0
        %1099 = vmatpush2.bf16.xpose.msra.mxu0 0
        %1100 = vmatprep.subr.bf16.mxu0 0
        %1101 = vmatpush2.bf16.xpose.msra.mxu0 0
        %1102 = vmatprep.subr.bf16.mxu0 0
        %1103 = vmatpush2.bf16.xpose.msra.mxu0 0
        %1104 = vmatprep.subr.bf16.mxu0 0
        %1105 = vmatpush2.bf16.xpose.msra.mxu0 0
        %1106 = vmatprep.subr.bf16.mxu0 0
        %1107 = vmatpush2.bf16.xpose.msra.mxu0 0
        %1108 = vmatprep.subr.bf16.mxu0 0
        %1109 = vmatpush2.bf16.xpose.msra.mxu0 0
        %1110 = vmatprep.mubr.bf16.mxu0 0
        %1111 = vmatmul.mubr.bf16.gmra.mxu0 %v1073
        %v1112 = vpop.f32.mrf.mxu0
        %v1113 = vadd.f32 0.0, %v1112
        %v1114 = vpop.f32.mrf.mxu0
        %v1115 = vpop.f32.mrf.mxu0
        %v1116 = vpop.f32.mrf.mxu0
        %1117 = vdwg.mxu0
        %v1118 = vmul.f32 %v1113, 0.35355338
        %v1119 = vsel %vm720, %v1118, -1e+30
        %v1120 = vsel %vm834, %v1119, -inf
        %1121 = vmax.xlane.f32.xlu0 %v1120
        %v1122 = vpop.xlane.xlu0 %1121
        %v1123 = vsub.f32 %v1119, %v1122
        %v1124 = vmul.f32 %v1123, 1.442695
        %v1125 = vpow.pop %v1124
        %v1126 = vsel %vm834, %v1125, 0.0
        %1127 = vadd.xlane.f32.xlu0 %v1126
        %v1128 = vpop.xlane.xlu0 %1127
        %v1129 = vrcp.pop %v1128
        %v1130 = vmul.f32 %v1125, %v1129
        %v1131 = vpack.c.bf16 %v1130, %v1130
        %1132 = vrot.lane.b32.xlu0 %v830, 48
        %v1133 = vpop.permute.xlu0 %1132
        %v1135 = vsel %vm834, %v1131, 0
        %v1138 = vsel %vm900, %v1133, 0
        %1140 = vmatprep.subr.bf16.mxu0 0
        %1141 = vmatpush1.bf16.msra.mxu0 0
        %1142 = vmatprep.subr.bf16.mxu0 0
        %1143 = vmatpush1.bf16.msra.mxu0 0
        %1144 = vmatprep.subr.bf16.mxu0 0
        %1145 = vmatpush1.bf16.msra.mxu0 0
        %1146 = vmatprep.subr.bf16.mxu0 0
        %1147 = vmatpush1.bf16.msra.mxu0 0
        %1148 = vmatprep.subr.bf16.mxu0 0
        %1149 = vmatpush1.bf16.msra.mxu0 0
        %1150 = vmatprep.subr.bf16.mxu0 0
        %1151 = vmatpush1.bf16.msra.mxu0 0
        %1152 = vmatprep.subr.bf16.mxu0 0
        %1153 = vmatpush1.bf16.msra.mxu0 0
        %1154 = vmatprep.subr.bf16.mxu0 0
        %1155 = vmatpush1.bf16.msra.mxu0 %v1138
        %1156 = vmatprep.subr.bf16.mxu0 0
        %1157 = vmatpush2.bf16.msra.mxu0 0
        %1158 = vmatprep.subr.bf16.mxu0 0
        %1159 = vmatpush2.bf16.msra.mxu0 0
        %1160 = vmatprep.subr.bf16.mxu0 0
        %1161 = vmatpush2.bf16.msra.mxu0 0
        %1162 = vmatprep.subr.bf16.mxu0 0
        %1163 = vmatpush2.bf16.msra.mxu0 0
        %1164 = vmatprep.subr.bf16.mxu0 0
        %1165 = vmatpush2.bf16.msra.mxu0 0
        %1166 = vmatprep.subr.bf16.mxu0 0
        %1167 = vmatpush2.bf16.msra.mxu0 0
        %1168 = vmatprep.subr.bf16.mxu0 0
        %1169 = vmatpush2.bf16.msra.mxu0 0
        %1170 = vmatprep.subr.bf16.mxu0 0
        %1171 = vmatpush2.bf16.msra.mxu0 0
        %1172 = vmatprep.mubr.bf16.mxu0 0
        %1173 = vmatmul.mubr.bf16.gmra.mxu0 %v1135
        %v1174 = vpop.f32.mrf.mxu0
        %v1175 = vadd.f32 0.0, %v1174
        %v1176 = vpop.f32.mrf.mxu0
        %v1177 = vpop.f32.mrf.mxu0
        %v1178 = vpop.f32.mrf.mxu0
        %1179 = vdwg.mxu0
        %v1180 = vpack.c.bf16 %v1175, %v1175
        %v1182 = vunpack.c.l.b16 %v1180
        %v1183 = vpack.c.b16 %v1182, %v1182
        %1184 = vrot.lane.b32.xlu0 %v1183, 16
        %v1185 = vpop.permute.xlu0 %1184
        %vm1187 = vcmask 191616
        %1188 = vst.msk [vmem:[#allocation2] sm:$0xf] %vm1187, %v1185
        %1189 = vrot.lane.b32.xlu0 %v830, 104
        %v1190 = vpop.permute.xlu0 %1189
        %1191 = vrot.lane.b32.xlu0 %v830, 72
        %v1192 = vpop.permute.xlu0 %1191
        %v1194 = vsel %vm834, %v1190, 0
        %v1197 = vsel %vm834, %v1192, 0
        %1199 = vmatprep.subr.bf16.mxu0 0
        %1200 = vmatpush1.bf16.xpose.msra.mxu0 0
        %1201 = vmatprep.subr.bf16.mxu0 0
        %1202 = vmatpush1.bf16.xpose.msra.mxu0 0
        %1203 = vmatprep.subr.bf16.mxu0 0
        %1204 = vmatpush1.bf16.xpose.msra.mxu0 0
        %1205 = vmatprep.subr.bf16.mxu0 0
        %1206 = vmatpush1.bf16.xpose.msra.mxu0 0
        %1207 = vmatprep.subr.bf16.mxu0 0
        %1208 = vmatpush1.bf16.xpose.msra.mxu0 0
        %1209 = vmatprep.subr.bf16.mxu0 0
        %1210 = vmatpush1.bf16.xpose.msra.mxu0 0
        %1211 = vmatprep.subr.bf16.mxu0 0
        %1212 = vmatpush1.bf16.xpose.msra.mxu0 0
        %1213 = vmatprep.subr.bf16.mxu0 0
        %1214 = vmatpush1.bf16.xpose.msra.mxu0 %v1197
        %1215 = vmatprep.subr.bf16.mxu0 0
        %1216 = vmatpush2.bf16.xpose.msra.mxu0 0
        %1217 = vmatprep.subr.bf16.mxu0 0
        %1218 = vmatpush2.bf16.xpose.msra.mxu0 0
        %1219 = vmatprep.subr.bf16.mxu0 0
        %1220 = vmatpush2.bf16.xpose.msra.mxu0 0
        %1221 = vmatprep.subr.bf16.mxu0 0
        %1222 = vmatpush2.bf16.xpose.msra.mxu0 0
        %1223 = vmatprep.subr.bf16.mxu0 0
        %1224 = vmatpush2.bf16.xpose.msra.mxu0 0
        %1225 = vmatprep.subr.bf16.mxu0 0
        %1226 = vmatpush2.bf16.xpose.msra.mxu0 0
        %1227 = vmatprep.subr.bf16.mxu0 0
        %1228 = vmatpush2.bf16.xpose.msra.mxu0 0
        %1229 = vmatprep.subr.bf16.mxu0 0
        %1230 = vmatpush2.bf16.xpose.msra.mxu0 0
        %1231 = vmatprep.mubr.bf16.mxu0 0
        %1232 = vmatmul.mubr.bf16.gmra.mxu0 %v1194
        %v1233 = vpop.f32.mrf.mxu0
        %v1234 = vadd.f32 0.0, %v1233
        %v1235 = vpop.f32.mrf.mxu0
        %v1236 = vpop.f32.mrf.mxu0
        %v1237 = vpop.f32.mrf.mxu0
        %1238 = vdwg.mxu0
        %v1239 = vmul.f32 %v1234, 0.35355338
        %v1240 = vsel %vm720, %v1239, -1e+30
        %v1241 = vsel %vm834, %v1240, -inf
        %1242 = vmax.xlane.f32.xlu0 %v1241
        %v1243 = vpop.xlane.xlu0 %1242
        %v1244 = vsub.f32 %v1240, %v1243
        %v1245 = vmul.f32 %v1244, 1.442695
        %v1246 = vpow.pop %v1245
        %v1247 = vsel %vm834, %v1246, 0.0
        %1248 = vadd.xlane.f32.xlu0 %v1247
        %v1249 = vpop.xlane.xlu0 %1248
        %v1250 = vrcp.pop %v1249
        %v1251 = vmul.f32 %v1246, %v1250
        %v1252 = vpack.c.bf16 %v1251, %v1251
        %1253 = vrot.lane.b32.xlu0 %v830, 40
        %v1254 = vpop.permute.xlu0 %1253
        %v1256 = vsel %vm834, %v1252, 0
        %v1259 = vsel %vm900, %v1254, 0
        %1261 = vmatprep.subr.bf16.mxu0 0
        %1262 = vmatpush1.bf16.msra.mxu0 0
        %1263 = vmatprep.subr.bf16.mxu0 0
        %1264 = vmatpush1.bf16.msra.mxu0 0
        %1265 = vmatprep.subr.bf16.mxu0 0
        %1266 = vmatpush1.bf16.msra.mxu0 0
        %1267 = vmatprep.subr.bf16.mxu0 0
        %1268 = vmatpush1.bf16.msra.mxu0 0
        %1269 = vmatprep.subr.bf16.mxu0 0
        %1270 = vmatpush1.bf16.msra.mxu0 0
        %1271 = vmatprep.subr.bf16.mxu0 0
        %1272 = vmatpush1.bf16.msra.mxu0 0
        %1273 = vmatprep.subr.bf16.mxu0 0
        %1274 = vmatpush1.bf16.msra.mxu0 0
        %1275 = vmatprep.subr.bf16.mxu0 0
        %1276 = vmatpush1.bf16.msra.mxu0 %v1259
        %1277 = vmatprep.subr.bf16.mxu0 0
        %1278 = vmatpush2.bf16.msra.mxu0 0
        %1279 = vmatprep.subr.bf16.mxu0 0
        %1280 = vmatpush2.bf16.msra.mxu0 0
        %1281 = vmatprep.subr.bf16.mxu0 0
        %1282 = vmatpush2.bf16.msra.mxu0 0
        %1283 = vmatprep.subr.bf16.mxu0 0
        %1284 = vmatpush2.bf16.msra.mxu0 0
        %1285 = vmatprep.subr.bf16.mxu0 0
        %1286 = vmatpush2.bf16.msra.mxu0 0
        %1287 = vmatprep.subr.bf16.mxu0 0
        %1288 = vmatpush2.bf16.msra.mxu0 0
        %1289 = vmatprep.subr.bf16.mxu0 0
        %1290 = vmatpush2.bf16.msra.mxu0 0
        %1291 = vmatprep.subr.bf16.mxu0 0
        %1292 = vmatpush2.bf16.msra.mxu0 0
        %1293 = vmatprep.mubr.bf16.mxu0 0
        %1294 = vmatmul.mubr.bf16.gmra.mxu0 %v1256
        %v1295 = vpop.f32.mrf.mxu0
        %v1296 = vadd.f32 0.0, %v1295
        %v1297 = vpop.f32.mrf.mxu0
        %v1298 = vpop.f32.mrf.mxu0
        %v1299 = vpop.f32.mrf.mxu0
        %1300 = vdwg.mxu0
        %v1301 = vpack.c.bf16 %v1296, %v1296
        %v1303 = vunpack.c.l.b16 %v1301
        %v1304 = vpack.c.b16 %v1303, %v1303
        %1305 = vrot.lane.b32.xlu0 %v1304, 24
        %v1306 = vpop.permute.xlu0 %1305
        %vm1308 = vcmask 257216
        %1309 = vst.msk [vmem:[#allocation2] sm:$0xf] %vm1308, %v1306
        %v1310 = vpack.c.bf16 %v827, %v827
        %1312 = vrot.lane.b32.xlu0 %v1310, 96
        %v1313 = vpop.permute.xlu0 %1312
        %v1315 = vsel %vm834, %v1310, 0
        %v1318 = vsel %vm834, %v1313, 0
        %1320 = vmatprep.subr.bf16.mxu0 0
        %1321 = vmatpush1.bf16.xpose.msra.mxu0 0
        %1322 = vmatprep.subr.bf16.mxu0 0
        %1323 = vmatpush1.bf16.xpose.msra.mxu0 0
        %1324 = vmatprep.subr.bf16.mxu0 0
        %1325 = vmatpush1.bf16.xpose.msra.mxu0 0
        %1326 = vmatprep.subr.bf16.mxu0 0
        %1327 = vmatpush1.bf16.xpose.msra.mxu0 0
        %1328 = vmatprep.subr.bf16.mxu0 0
        %1329 = vmatpush1.bf16.xpose.msra.mxu0 0
        %1330 = vmatprep.subr.bf16.mxu0 0
        %1331 = vmatpush1.bf16.xpose.msra.mxu0 0
        %1332 = vmatprep.subr.bf16.mxu0 0
        %1333 = vmatpush1.bf16.xpose.msra.mxu0 0
        %1334 = vmatprep.subr.bf16.mxu0 0
        %1335 = vmatpush1.bf16.xpose.msra.mxu0 %v1318
        %1336 = vmatprep.subr.bf16.mxu0 0
        %1337 = vmatpush2.bf16.xpose.msra.mxu0 0
        %1338 = vmatprep.subr.bf16.mxu0 0
        %1339 = vmatpush2.bf16.xpose.msra.mxu0 0
        %1340 = vmatprep.subr.bf16.mxu0 0
        %1341 = vmatpush2.bf16.xpose.msra.mxu0 0
        %1342 = vmatprep.subr.bf16.mxu0 0
        %1343 = vmatpush2.bf16.xpose.msra.mxu0 0
        %1344 = vmatprep.subr.bf16.mxu0 0
        %1345 = vmatpush2.bf16.xpose.msra.mxu0 0
        %1346 = vmatprep.subr.bf16.mxu0 0
        %1347 = vmatpush2.bf16.xpose.msra.mxu0 0
        %1348 = vmatprep.subr.bf16.mxu0 0
        %1349 = vmatpush2.bf16.xpose.msra.mxu0 0
        %1350 = vmatprep.subr.bf16.mxu0 0
        %1351 = vmatpush2.bf16.xpose.msra.mxu0 0
        %1352 = vmatprep.mubr.bf16.mxu0 0
        %1353 = vmatmul.mubr.bf16.gmra.mxu0 %v1315
        %v1354 = vpop.f32.mrf.mxu0
        %v1355 = vadd.f32 0.0, %v1354
        %v1356 = vpop.f32.mrf.mxu0
        %v1357 = vpop.f32.mrf.mxu0
        %v1358 = vpop.f32.mrf.mxu0
        %1359 = vdwg.mxu0
        %v1360 = vmul.f32 %v1355, 0.35355338
        %v1361 = vsel %vm720, %v1360, -1e+30
        %v1362 = vsel %vm834, %v1361, -inf
        %1363 = vmax.xlane.f32.xlu0 %v1362
        %v1364 = vpop.xlane.xlu0 %1363
        %v1365 = vsub.f32 %v1361, %v1364
        %v1366 = vmul.f32 %v1365, 1.442695
        %v1367 = vpow.pop %v1366
        %v1368 = vsel %vm834, %v1367, 0.0
        %1369 = vadd.xlane.f32.xlu0 %v1368
        %v1370 = vpop.xlane.xlu0 %1369
        %v1371 = vrcp.pop %v1370
        %v1372 = vmul.f32 %v1367, %v1371
        %v1373 = vpack.c.bf16 %v1372, %v1372
        %1374 = vrot.lane.b32.xlu0 %v1310, 64
        %v1375 = vpop.permute.xlu0 %1374
        %v1377 = vsel %vm834, %v1373, 0
        %v1380 = vsel %vm900, %v1375, 0
        %1382 = vmatprep.subr.bf16.mxu0 0
        %1383 = vmatpush1.bf16.msra.mxu0 0
        %1384 = vmatprep.subr.bf16.mxu0 0
        %1385 = vmatpush1.bf16.msra.mxu0 0
        %1386 = vmatprep.subr.bf16.mxu0 0
        %1387 = vmatpush1.bf16.msra.mxu0 0
        %1388 = vmatprep.subr.bf16.mxu0 0
        %1389 = vmatpush1.bf16.msra.mxu0 0
        %1390 = vmatprep.subr.bf16.mxu0 0
        %1391 = vmatpush1.bf16.msra.mxu0 0
        %1392 = vmatprep.subr.bf16.mxu0 0
        %1393 = vmatpush1.bf16.msra.mxu0 0
        %1394 = vmatprep.subr.bf16.mxu0 0
        %1395 = vmatpush1.bf16.msra.mxu0 0
        %1396 = vmatprep.subr.bf16.mxu0 0
        %1397 = vmatpush1.bf16.msra.mxu0 %v1380
        %1398 = vmatprep.subr.bf16.mxu0 0
        %1399 = vmatpush2.bf16.msra.mxu0 0
        %1400 = vmatprep.subr.bf16.mxu0 0
        %1401 = vmatpush2.bf16.msra.mxu0 0
        %1402 = vmatprep.subr.bf16.mxu0 0
        %1403 = vmatpush2.bf16.msra.mxu0 0
        %1404 = vmatprep.subr.bf16.mxu0 0
        %1405 = vmatpush2.bf16.msra.mxu0 0
        %1406 = vmatprep.subr.bf16.mxu0 0
        %1407 = vmatpush2.bf16.msra.mxu0 0
        %1408 = vmatprep.subr.bf16.mxu0 0
        %1409 = vmatpush2.bf16.msra.mxu0 0
        %1410 = vmatprep.subr.bf16.mxu0 0
        %1411 = vmatpush2.bf16.msra.mxu0 0
        %1412 = vmatprep.subr.bf16.mxu0 0
        %1413 = vmatpush2.bf16.msra.mxu0 0
        %1414 = vmatprep.mubr.bf16.mxu0 0
        %1415 = vmatmul.mubr.bf16.gmra.mxu0 %v1377
        %v1416 = vpop.f32.mrf.mxu0
        %v1417 = vadd.f32 0.0, %v1416
        %v1418 = vpop.f32.mrf.mxu0
        %v1419 = vpop.f32.mrf.mxu0
        %v1420 = vpop.f32.mrf.mxu0
        %1421 = vdwg.mxu0
        %v1422 = vpack.c.bf16 %v1417, %v1417
        %1423 = vst.msk [vmem:[#allocation2 + $0x4] sm:$0xf] %vm945, %v1422
        %1424 = vrot.lane.b32.xlu0 %v1310, 120
        %v1425 = vpop.permute.xlu0 %1424
        %1426 = vrot.lane.b32.xlu0 %v1310, 88
        %v1427 = vpop.permute.xlu0 %1426
        %v1429 = vsel %vm834, %v1425, 0
        %v1432 = vsel %vm834, %v1427, 0
        %1434 = vmatprep.subr.bf16.mxu0 0
        %1435 = vmatpush1.bf16.xpose.msra.mxu0 0
        %1436 = vmatprep.subr.bf16.mxu0 0
        %1437 = vmatpush1.bf16.xpose.msra.mxu0 0
        %1438 = vmatprep.subr.bf16.mxu0 0
        %1439 = vmatpush1.bf16.xpose.msra.mxu0 0
        %1440 = vmatprep.subr.bf16.mxu0 0
        %1441 = vmatpush1.bf16.xpose.msra.mxu0 0
        %1442 = vmatprep.subr.bf16.mxu0 0
        %1443 = vmatpush1.bf16.xpose.msra.mxu0 0
        %1444 = vmatprep.subr.bf16.mxu0 0
        %1445 = vmatpush1.bf16.xpose.msra.mxu0 0
        %1446 = vmatprep.subr.bf16.mxu0 0
        %1447 = vmatpush1.bf16.xpose.msra.mxu0 0
        %1448 = vmatprep.subr.bf16.mxu0 0
        %1449 = vmatpush1.bf16.xpose.msra.mxu0 %v1432
        %1450 = vmatprep.subr.bf16.mxu0 0
        %1451 = vmatpush2.bf16.xpose.msra.mxu0 0
        %1452 = vmatprep.subr.bf16.mxu0 0
        %1453 = vmatpush2.bf16.xpose.msra.mxu0 0
        %1454 = vmatprep.subr.bf16.mxu0 0
        %1455 = vmatpush2.bf16.xpose.msra.mxu0 0
        %1456 = vmatprep.subr.bf16.mxu0 0
        %1457 = vmatpush2.bf16.xpose.msra.mxu0 0
        %1458 = vmatprep.subr.bf16.mxu0 0
        %1459 = vmatpush2.bf16.xpose.msra.mxu0 0
        %1460 = vmatprep.subr.bf16.mxu0 0
        %1461 = vmatpush2.bf16.xpose.msra.mxu0 0
        %1462 = vmatprep.subr.bf16.mxu0 0
        %1463 = vmatpush2.bf16.xpose.msra.mxu0 0
        %1464 = vmatprep.subr.bf16.mxu0 0
        %1465 = vmatpush2.bf16.xpose.msra.mxu0 0
        %1466 = vmatprep.mubr.bf16.mxu0 0
        %1467 = vmatmul.mubr.bf16.gmra.mxu0 %v1429
        %v1468 = vpop.f32.mrf.mxu0
        %v1469 = vadd.f32 0.0, %v1468
        %v1470 = vpop.f32.mrf.mxu0
        %v1471 = vpop.f32.mrf.mxu0
        %v1472 = vpop.f32.mrf.mxu0
        %1473 = vdwg.mxu0
        %v1474 = vmul.f32 %v1469, 0.35355338
        %v1475 = vsel %vm720, %v1474, -1e+30
        %v1476 = vsel %vm834, %v1475, -inf
        %1477 = vmax.xlane.f32.xlu0 %v1476
        %v1478 = vpop.xlane.xlu0 %1477
        %v1479 = vsub.f32 %v1475, %v1478
        %v1480 = vmul.f32 %v1479, 1.442695
        %v1481 = vpow.pop %v1480
        %v1482 = vsel %vm834, %v1481, 0.0
        %1483 = vadd.xlane.f32.xlu0 %v1482
        %v1484 = vpop.xlane.xlu0 %1483
        %v1485 = vrcp.pop %v1484
        %v1486 = vmul.f32 %v1481, %v1485
        %v1487 = vpack.c.bf16 %v1486, %v1486
        %1488 = vrot.lane.b32.xlu0 %v1310, 56
        %v1489 = vpop.permute.xlu0 %1488
        %v1491 = vsel %vm834, %v1487, 0
        %v1494 = vsel %vm900, %v1489, 0
        %1496 = vmatprep.subr.bf16.mxu0 0
        %1497 = vmatpush1.bf16.msra.mxu0 0
        %1498 = vmatprep.subr.bf16.mxu0 0
        %1499 = vmatpush1.bf16.msra.mxu0 0
        %1500 = vmatprep.subr.bf16.mxu0 0
        %1501 = vmatpush1.bf16.msra.mxu0 0
        %1502 = vmatprep.subr.bf16.mxu0 0
        %1503 = vmatpush1.bf16.msra.mxu0 0
        %1504 = vmatprep.subr.bf16.mxu0 0
        %1505 = vmatpush1.bf16.msra.mxu0 0
        %1506 = vmatprep.subr.bf16.mxu0 0
        %1507 = vmatpush1.bf16.msra.mxu0 0
        %1508 = vmatprep.subr.bf16.mxu0 0
        %1509 = vmatpush1.bf16.msra.mxu0 0
        %1510 = vmatprep.subr.bf16.mxu0 0
        %1511 = vmatpush1.bf16.msra.mxu0 %v1494
        %1512 = vmatprep.subr.bf16.mxu0 0
        %1513 = vmatpush2.bf16.msra.mxu0 0
        %1514 = vmatprep.subr.bf16.mxu0 0
        %1515 = vmatpush2.bf16.msra.mxu0 0
        %1516 = vmatprep.subr.bf16.mxu0 0
        %1517 = vmatpush2.bf16.msra.mxu0 0
        %1518 = vmatprep.subr.bf16.mxu0 0
        %1519 = vmatpush2.bf16.msra.mxu0 0
        %1520 = vmatprep.subr.bf16.mxu0 0
        %1521 = vmatpush2.bf16.msra.mxu0 0
        %1522 = vmatprep.subr.bf16.mxu0 0
        %1523 = vmatpush2.bf16.msra.mxu0 0
        %1524 = vmatprep.subr.bf16.mxu0 0
        %1525 = vmatpush2.bf16.msra.mxu0 0
        %1526 = vmatprep.subr.bf16.mxu0 0
        %1527 = vmatpush2.bf16.msra.mxu0 0
        %1528 = vmatprep.mubr.bf16.mxu0 0
        %1529 = vmatmul.mubr.bf16.gmra.mxu0 %v1491
        %v1530 = vpop.f32.mrf.mxu0
        %v1531 = vadd.f32 0.0, %v1530
        %v1532 = vpop.f32.mrf.mxu0
        %v1533 = vpop.f32.mrf.mxu0
        %v1534 = vpop.f32.mrf.mxu0
        %1535 = vdwg.mxu0
        %v1536 = vpack.c.bf16 %v1531, %v1531
        %v1538 = vunpack.c.l.b16 %v1536
        %v1539 = vpack.c.b16 %v1538, %v1538
        %1540 = vrot.lane.b32.xlu0 %v1539, 8
        %v1541 = vpop.permute.xlu0 %1540
        %1543 = vst.msk [vmem:[#allocation2 + $0x4] sm:$0xf] %vm1066, %v1541
        %1544 = vrot.lane.b32.xlu0 %v1310, 112
        %v1545 = vpop.permute.xlu0 %1544
        %1546 = vrot.lane.b32.xlu0 %v1310, 80
        %v1547 = vpop.permute.xlu0 %1546
        %v1549 = vsel %vm834, %v1545, 0
        %v1552 = vsel %vm834, %v1547, 0
        %1554 = vmatprep.subr.bf16.mxu0 0
        %1555 = vmatpush1.bf16.xpose.msra.mxu0 0
        %1556 = vmatprep.subr.bf16.mxu0 0
        %1557 = vmatpush1.bf16.xpose.msra.mxu0 0
        %1558 = vmatprep.subr.bf16.mxu0 0
        %1559 = vmatpush1.bf16.xpose.msra.mxu0 0
        %1560 = vmatprep.subr.bf16.mxu0 0
        %1561 = vmatpush1.bf16.xpose.msra.mxu0 0
        %1562 = vmatprep.subr.bf16.mxu0 0
        %1563 = vmatpush1.bf16.xpose.msra.mxu0 0
        %1564 = vmatprep.subr.bf16.mxu0 0
        %1565 = vmatpush1.bf16.xpose.msra.mxu0 0
        %1566 = vmatprep.subr.bf16.mxu0 0
        %1567 = vmatpush1.bf16.xpose.msra.mxu0 0
        %1568 = vmatprep.subr.bf16.mxu0 0
        %1569 = vmatpush1.bf16.xpose.msra.mxu0 %v1552
        %1570 = vmatprep.subr.bf16.mxu0 0
        %1571 = vmatpush2.bf16.xpose.msra.mxu0 0
        %1572 = vmatprep.subr.bf16.mxu0 0
        %1573 = vmatpush2.bf16.xpose.msra.mxu0 0
        %1574 = vmatprep.subr.bf16.mxu0 0
        %1575 = vmatpush2.bf16.xpose.msra.mxu0 0
        %1576 = vmatprep.subr.bf16.mxu0 0
        %1577 = vmatpush2.bf16.xpose.msra.mxu0 0
        %1578 = vmatprep.subr.bf16.mxu0 0
        %1579 = vmatpush2.bf16.xpose.msra.mxu0 0
        %1580 = vmatprep.subr.bf16.mxu0 0
        %1581 = vmatpush2.bf16.xpose.msra.mxu0 0
        %1582 = vmatprep.subr.bf16.mxu0 0
        %1583 = vmatpush2.bf16.xpose.msra.mxu0 0
        %1584 = vmatprep.subr.bf16.mxu0 0
        %1585 = vmatpush2.bf16.xpose.msra.mxu0 0
        %1586 = vmatprep.mubr.bf16.mxu0 0
        %1587 = vmatmul.mubr.bf16.gmra.mxu0 %v1549
        %v1588 = vpop.f32.mrf.mxu0
        %v1589 = vadd.f32 0.0, %v1588
        %v1590 = vpop.f32.mrf.mxu0
        %v1591 = vpop.f32.mrf.mxu0
        %v1592 = vpop.f32.mrf.mxu0
        %1593 = vdwg.mxu0
        %v1594 = vmul.f32 %v1589, 0.35355338
        %v1595 = vsel %vm720, %v1594, -1e+30
        %v1596 = vsel %vm834, %v1595, -inf
        %1597 = vmax.xlane.f32.xlu0 %v1596
        %v1598 = vpop.xlane.xlu0 %1597
        %v1599 = vsub.f32 %v1595, %v1598
        %v1600 = vmul.f32 %v1599, 1.442695
        %v1601 = vpow.pop %v1600
        %v1602 = vsel %vm834, %v1601, 0.0
        %1603 = vadd.xlane.f32.xlu0 %v1602
        %v1604 = vpop.xlane.xlu0 %1603
        %v1605 = vrcp.pop %v1604
        %v1606 = vmul.f32 %v1601, %v1605
        %v1607 = vpack.c.bf16 %v1606, %v1606
        %1608 = vrot.lane.b32.xlu0 %v1310, 48
        %v1609 = vpop.permute.xlu0 %1608
        %v1611 = vsel %vm834, %v1607, 0
        %v1614 = vsel %vm900, %v1609, 0
        %1616 = vmatprep.subr.bf16.mxu0 0
        %1617 = vmatpush1.bf16.msra.mxu0 0
        %1618 = vmatprep.subr.bf16.mxu0 0
        %1619 = vmatpush1.bf16.msra.mxu0 0
        %1620 = vmatprep.subr.bf16.mxu0 0
        %1621 = vmatpush1.bf16.msra.mxu0 0
        %1622 = vmatprep.subr.bf16.mxu0 0
        %1623 = vmatpush1.bf16.msra.mxu0 0
        %1624 = vmatprep.subr.bf16.mxu0 0
        %1625 = vmatpush1.bf16.msra.mxu0 0
        %1626 = vmatprep.subr.bf16.mxu0 0
        %1627 = vmatpush1.bf16.msra.mxu0 0
        %1628 = vmatprep.subr.bf16.mxu0 0
        %1629 = vmatpush1.bf16.msra.mxu0 0
        %1630 = vmatprep.subr.bf16.mxu0 0
        %1631 = vmatpush1.bf16.msra.mxu0 %v1614
        %1632 = vmatprep.subr.bf16.mxu0 0
        %1633 = vmatpush2.bf16.msra.mxu0 0
        %1634 = vmatprep.subr.bf16.mxu0 0
        %1635 = vmatpush2.bf16.msra.mxu0 0
        %1636 = vmatprep.subr.bf16.mxu0 0
        %1637 = vmatpush2.bf16.msra.mxu0 0
        %1638 = vmatprep.subr.bf16.mxu0 0
        %1639 = vmatpush2.bf16.msra.mxu0 0
        %1640 = vmatprep.subr.bf16.mxu0 0
        %1641 = vmatpush2.bf16.msra.mxu0 0
        %1642 = vmatprep.subr.bf16.mxu0 0
        %1643 = vmatpush2.bf16.msra.mxu0 0
        %1644 = vmatprep.subr.bf16.mxu0 0
        %1645 = vmatpush2.bf16.msra.mxu0 0
        %1646 = vmatprep.subr.bf16.mxu0 0
        %1647 = vmatpush2.bf16.msra.mxu0 0
        %1648 = vmatprep.mubr.bf16.mxu0 0
        %1649 = vmatmul.mubr.bf16.gmra.mxu0 %v1611
        %v1650 = vpop.f32.mrf.mxu0
        %v1651 = vadd.f32 0.0, %v1650
        %v1652 = vpop.f32.mrf.mxu0
        %v1653 = vpop.f32.mrf.mxu0
        %v1654 = vpop.f32.mrf.mxu0
        %1655 = vdwg.mxu0
        %v1656 = vpack.c.bf16 %v1651, %v1651
        %v1658 = vunpack.c.l.b16 %v1656
        %v1659 = vpack.c.b16 %v1658, %v1658
        %1660 = vrot.lane.b32.xlu0 %v1659, 16
        %v1661 = vpop.permute.xlu0 %1660
        %1663 = vst.msk [vmem:[#allocation2 + $0x4] sm:$0xf] %vm1187, %v1661
        %1664 = vrot.lane.b32.xlu0 %v1310, 104
        %v1665 = vpop.permute.xlu0 %1664
        %1666 = vrot.lane.b32.xlu0 %v1310, 72
        %v1667 = vpop.permute.xlu0 %1666
        %v1669 = vsel %vm834, %v1665, 0
        %v1672 = vsel %vm834, %v1667, 0
        %1674 = vmatprep.subr.bf16.mxu0 0
        %1675 = vmatpush1.bf16.xpose.msra.mxu0 0
        %1676 = vmatprep.subr.bf16.mxu0 0
        %1677 = vmatpush1.bf16.xpose.msra.mxu0 0
        %1678 = vmatprep.subr.bf16.mxu0 0
        %1679 = vmatpush1.bf16.xpose.msra.mxu0 0
        %1680 = vmatprep.subr.bf16.mxu0 0
        %1681 = vmatpush1.bf16.xpose.msra.mxu0 0
        %1682 = vmatprep.subr.bf16.mxu0 0
        %1683 = vmatpush1.bf16.xpose.msra.mxu0 0
        %1684 = vmatprep.subr.bf16.mxu0 0
        %1685 = vmatpush1.bf16.xpose.msra.mxu0 0
        %1686 = vmatprep.subr.bf16.mxu0 0
        %1687 = vmatpush1.bf16.xpose.msra.mxu0 0
        %1688 = vmatprep.subr.bf16.mxu0 0
        %1689 = vmatpush1.bf16.xpose.msra.mxu0 %v1672
        %1690 = vmatprep.subr.bf16.mxu0 0
        %1691 = vmatpush2.bf16.xpose.msra.mxu0 0
        %1692 = vmatprep.subr.bf16.mxu0 0
        %1693 = vmatpush2.bf16.xpose.msra.mxu0 0
        %1694 = vmatprep.subr.bf16.mxu0 0
        %1695 = vmatpush2.bf16.xpose.msra.mxu0 0
        %1696 = vmatprep.subr.bf16.mxu0 0
        %1697 = vmatpush2.bf16.xpose.msra.mxu0 0
        %1698 = vmatprep.subr.bf16.mxu0 0
        %1699 = vmatpush2.bf16.xpose.msra.mxu0 0
        %1700 = vmatprep.subr.bf16.mxu0 0
        %1701 = vmatpush2.bf16.xpose.msra.mxu0 0
        %1702 = vmatprep.subr.bf16.mxu0 0
        %1703 = vmatpush2.bf16.xpose.msra.mxu0 0
        %1704 = vmatprep.subr.bf16.mxu0 0
        %1705 = vmatpush2.bf16.xpose.msra.mxu0 0
        %1706 = vmatprep.mubr.bf16.mxu0 0
        %1707 = vmatmul.mubr.bf16.gmra.mxu0 %v1669
        %v1708 = vpop.f32.mrf.mxu0
        %v1709 = vadd.f32 0.0, %v1708
        %v1710 = vpop.f32.mrf.mxu0
        %v1711 = vpop.f32.mrf.mxu0
        %v1712 = vpop.f32.mrf.mxu0
        %1713 = vdwg.mxu0
        %v1714 = vmul.f32 %v1709, 0.35355338
        %v1715 = vsel %vm720, %v1714, -1e+30
        %v1716 = vsel %vm834, %v1715, -inf
        %1717 = vmax.xlane.f32.xlu0 %v1716
        %v1718 = vpop.xlane.xlu0 %1717
        %v1719 = vsub.f32 %v1715, %v1718
        %v1720 = vmul.f32 %v1719, 1.442695
        %v1721 = vpow.pop %v1720
        %v1722 = vsel %vm834, %v1721, 0.0
        %1723 = vadd.xlane.f32.xlu0 %v1722
        %v1724 = vpop.xlane.xlu0 %1723
        %v1725 = vrcp.pop %v1724
        %v1726 = vmul.f32 %v1721, %v1725
        %v1727 = vpack.c.bf16 %v1726, %v1726
        %1728 = vrot.lane.b32.xlu0 %v1310, 40
        %v1729 = vpop.permute.xlu0 %1728
        %v1731 = vsel %vm834, %v1727, 0
        %v1734 = vsel %vm900, %v1729, 0
        %1736 = vmatprep.subr.bf16.mxu0 0
        %1737 = vmatpush1.bf16.msra.mxu0 0
        %1738 = vmatprep.subr.bf16.mxu0 0
        %1739 = vmatpush1.bf16.msra.mxu0 0
        %1740 = vmatprep.subr.bf16.mxu0 0
        %1741 = vmatpush1.bf16.msra.mxu0 0
        %1742 = vmatprep.subr.bf16.mxu0 0
        %1743 = vmatpush1.bf16.msra.mxu0 0
        %1744 = vmatprep.subr.bf16.mxu0 0
        %1745 = vmatpush1.bf16.msra.mxu0 0
        %1746 = vmatprep.subr.bf16.mxu0 0
        %1747 = vmatpush1.bf16.msra.mxu0 0
        %1748 = vmatprep.subr.bf16.mxu0 0
        %1749 = vmatpush1.bf16.msra.mxu0 0
        %1750 = vmatprep.subr.bf16.mxu0 0
        %1751 = vmatpush1.bf16.msra.mxu0 %v1734
        %1752 = vmatprep.subr.bf16.mxu0 0
        %1753 = vmatpush2.bf16.msra.mxu0 0
        %1754 = vmatprep.subr.bf16.mxu0 0
        %1755 = vmatpush2.bf16.msra.mxu0 0
        %1756 = vmatprep.subr.bf16.mxu0 0
        %1757 = vmatpush2.bf16.msra.mxu0 0
        %1758 = vmatprep.subr.bf16.mxu0 0
        %1759 = vmatpush2.bf16.msra.mxu0 0
        %1760 = vmatprep.subr.bf16.mxu0 0
        %1761 = vmatpush2.bf16.msra.mxu0 0
        %1762 = vmatprep.subr.bf16.mxu0 0
        %1763 = vmatpush2.bf16.msra.mxu0 0
        %1764 = vmatprep.subr.bf16.mxu0 0
        %1765 = vmatpush2.bf16.msra.mxu0 0
        %1766 = vmatprep.subr.bf16.mxu0 0
        %1767 = vmatpush2.bf16.msra.mxu0 0
        %1768 = vmatprep.mubr.bf16.mxu0 0
        %1769 = vmatmul.mubr.bf16.gmra.mxu0 %v1731
        %v1770 = vpop.f32.mrf.mxu0
        %v1771 = vadd.f32 0.0, %v1770
        %v1772 = vpop.f32.mrf.mxu0
        %v1773 = vpop.f32.mrf.mxu0
        %v1774 = vpop.f32.mrf.mxu0
        %1775 = vdwg.mxu0
        %v1776 = vpack.c.bf16 %v1771, %v1771
        %v1778 = vunpack.c.l.b16 %v1776
        %v1779 = vpack.c.b16 %v1778, %v1778
        %1780 = vrot.lane.b32.xlu0 %v1779, 24
        %v1781 = vpop.permute.xlu0 %1780
        %1783 = vst.msk [vmem:[#allocation2 + $0x4] sm:$0xf] %vm1308, %v1781
        %v1784 = vld [vmem:[#allocation2] sm:$0xf]
        %v1785 = vld [vmem:[#allocation2 + $0x4] sm:$0xf]
        %v1787 = vlaneseq
        %v1788 = vshrl.u32 %v1787, 7
        %v1789 = vsub.s32 0, %v1788
        %v1790 = vrot.slane %v687, %v1789
        %v1794 = vunpack.c.l.b16 %v1784
        %v1795 = vunpack.c.l.b16 %v1785
        %v1796 = vpack.c.b16 %v1795, %v1794
        %v1801 = vunpack.c.l.b16 %v683
        %v1802 = vunpack.c.l.b16 %v684
        %v1803 = vunpack.c.l.b16 %v685
        %v1804 = vunpack.c.l.b16 %v686
        %v1805 = vpack.c.b16 %v1802, %v1801
        %v1806 = vpack.c.b16 %v1804, %v1803
        %v1810 = vsel %vm723, %v1796, 0
        %1812 = vmatprep.subr.bf16.mxu0 0
        %1813 = vmatpush1.bf16.msra.mxu0 0
        %1814 = vmatprep.subr.bf16.mxu0 0
        %1815 = vmatpush1.bf16.msra.mxu0 0
        %1816 = vmatprep.subr.bf16.mxu0 0
        %1817 = vmatpush1.bf16.msra.mxu0 0
        %1818 = vmatprep.subr.bf16.mxu0 0
        %1819 = vmatpush1.bf16.msra.mxu0 0
        %1820 = vmatprep.subr.bf16.mxu0 0
        %1821 = vmatpush1.bf16.msra.mxu0 0
        %1822 = vmatprep.subr.bf16.mxu0 0
        %1823 = vmatpush1.bf16.msra.mxu0 0
        %1824 = vmatprep.subr.bf16.mxu0 0
        %1825 = vmatpush1.bf16.msra.mxu0 %v1806
        %1826 = vmatprep.subr.bf16.mxu0 0
        %1827 = vmatpush1.bf16.msra.mxu0 %v1805
        %1828 = vmatprep.subr.bf16.mxu0 0
        %1829 = vmatpush2.bf16.msra.mxu0 0
        %1830 = vmatprep.subr.bf16.mxu0 0
        %1831 = vmatpush2.bf16.msra.mxu0 0
        %1832 = vmatprep.subr.bf16.mxu0 0
        %1833 = vmatpush2.bf16.msra.mxu0 0
        %1834 = vmatprep.subr.bf16.mxu0 0
        %1835 = vmatpush2.bf16.msra.mxu0 0
        %1836 = vmatprep.subr.bf16.mxu0 0
        %1837 = vmatpush2.bf16.msra.mxu0 0
        %1838 = vmatprep.subr.bf16.mxu0 0
        %1839 = vmatpush2.bf16.msra.mxu0 0
        %1840 = vmatprep.subr.bf16.mxu0 0
        %1841 = vmatpush2.bf16.msra.mxu0 0
        %1842 = vmatprep.subr.bf16.mxu0 0
        %1843 = vmatpush2.bf16.msra.mxu0 0
        %1844 = vmatprep.mubr.bf16.mxu0 0
        %1845 = vmatmul.mubr.bf16.gmra.mxu0 %v1810
        %v1846 = vpop.f32.mrf.mxu0
        %v1847 = vadd.f32 %v1790, %v1846
        %v1848 = vpop.f32.mrf.mxu0
        %v1849 = vpop.f32.mrf.mxu0
        %v1850 = vadd.f32 %v1790, %v1849
        %v1851 = vpop.f32.mrf.mxu0
        %1852 = vdwg.mxu0
        %v1853 = vadd.f32 %v721, %v1847
        %v1854 = vadd.f32 %v722, %v1850
        %v1855 = vsel %vm723, %v1853, 0.0
        %1856 = vadd.xlane.f32.xlu0 %v1855
        %v1857 = vpop.xlane.xlu0 %1856
        %v1858 = vsel %vm723, %v1854, 0.0
        %1859 = vadd.xlane.f32.xlu0 %v1858
        %v1860 = vpop.xlane.xlu0 %1859
        %v1861 = vmul.f32 %v1857, %v730
        %v1862 = vmul.f32 %v1860, %v730
        %v1863 = vsub.f32 %v1853, %v1861
        %v1864 = vsub.f32 %v1854, %v1862
        %v1865 = vmul.f32 %v1863, %v1863
        %v1866 = vmul.f32 %v1864, %v1864
        %v1867 = vsel %vm723, %v1865, 0.0
        %1868 = vadd.xlane.f32.xlu0 %v1867
        %v1869 = vpop.xlane.xlu0 %1868
        %v1870 = vsel %vm723, %v1866, 0.0
        %1871 = vadd.xlane.f32.xlu0 %v1870
        %v1872 = vpop.xlane.xlu0 %1871
        %v1873 = vmul.f32 %v1869, %v730
        %v1874 = vmul.f32 %v1872, %v730
        %v1875 = vadd.f32 %v1873, 1e-05
        %v1876 = vadd.f32 %v1874, 1e-05
        %v1877 = vrsqrt.pop %v1875
        %v1878 = vrsqrt.pop %v1876
        %v1879 = vmul.f32 %v1863, %v1877
        %v1880 = vmul.f32 %v1864, %v1878
        %v1882 = vlaneseq
        %v1883 = vshrl.u32 %v1882, 7
        %v1884 = vsub.s32 0, %v1883
        %v1885 = vrot.slane %v712, %v1884
        %v1887 = vmul.f32 %v1879, %v1885
        %v1888 = vmul.f32 %v1880, %v1885
        %v1890 = vlaneseq
        %v1891 = vshrl.u32 %v1890, 7
        %v1892 = vsub.s32 0, %v1891
        %v1893 = vrot.slane %v713, %v1892
        %v1895 = vadd.f32 %v1887, %v1893
        %v1896 = vadd.f32 %v1888, %v1893
        %v1897 = vpack.c.bf16 %v1896, %v1895
        %v1899 = vlaneseq
        %v1900 = vshrl.u32 %v1899, 7
        %v1901 = vsub.s32 0, %v1900
        %v1902 = vrot.slane %v692, %v1901
        %v1908 = vunpack.c.l.b16 %v688
        %v1909 = vunpack.c.l.b16 %v689
        %v1910 = vunpack.c.l.b16 %v690
        %v1911 = vunpack.c.l.b16 %v691
        %v1912 = vpack.c.b16 %v1909, %v1908
        %v1913 = vpack.c.b16 %v1911, %v1910
        %v1917 = vsel %vm723, %v1897, 0
        %1919 = vmatprep.subr.bf16.mxu0 0
        %1920 = vmatpush1.bf16.msra.mxu0 0
        %1921 = vmatprep.subr.bf16.mxu0 0
        %1922 = vmatpush1.bf16.msra.mxu0 0
        %1923 = vmatprep.subr.bf16.mxu0 0
        %1924 = vmatpush1.bf16.msra.mxu0 0
        %1925 = vmatprep.subr.bf16.mxu0 0
        %1926 = vmatpush1.bf16.msra.mxu0 0
        %1927 = vmatprep.subr.bf16.mxu0 0
        %1928 = vmatpush1.bf16.msra.mxu0 0
        %1929 = vmatprep.subr.bf16.mxu0 0
        %1930 = vmatpush1.bf16.msra.mxu0 0
        %1931 = vmatprep.subr.bf16.mxu0 0
        %1932 = vmatpush1.bf16.msra.mxu0 %v1913
        %1933 = vmatprep.subr.bf16.mxu0 0
        %1934 = vmatpush1.bf16.msra.mxu0 %v1912
        %1935 = vmatprep.subr.bf16.mxu0 0
        %1936 = vmatpush2.bf16.msra.mxu0 0
        %1937 = vmatprep.subr.bf16.mxu0 0
        %1938 = vmatpush2.bf16.msra.mxu0 0
        %1939 = vmatprep.subr.bf16.mxu0 0
        %1940 = vmatpush2.bf16.msra.mxu0 0
        %1941 = vmatprep.subr.bf16.mxu0 0
        %1942 = vmatpush2.bf16.msra.mxu0 0
        %1943 = vmatprep.subr.bf16.mxu0 0
        %1944 = vmatpush2.bf16.msra.mxu0 0
        %1945 = vmatprep.subr.bf16.mxu0 0
        %1946 = vmatpush2.bf16.msra.mxu0 0
        %1947 = vmatprep.subr.bf16.mxu0 0
        %1948 = vmatpush2.bf16.msra.mxu0 0
        %1949 = vmatprep.subr.bf16.mxu0 0
        %1950 = vmatpush2.bf16.msra.mxu0 0
        %1951 = vmatprep.mubr.bf16.mxu0 0
        %1952 = vmatmul.mubr.bf16.gmra.mxu0 %v1917
        %v1953 = vpop.f32.mrf.mxu0
        %v1954 = vadd.f32 %v1902, %v1953
        %v1955 = vpop.f32.mrf.mxu0
        %v1956 = vpop.f32.mrf.mxu0
        %v1957 = vadd.f32 %v1902, %v1956
        %v1958 = vpop.f32.mrf.mxu0
        %1959 = vdwg.mxu0
        %v1960 = vmul.f32 %v1954, 0.5
        %v1961 = vmul.f32 %v1957, 0.5
        %v1962 = vmul.f32 %v1954, 0.70710677
        %v1963 = vmul.f32 %v1957, 0.70710677
        %v1964 = verf.f32.pop %v1962
        %v1965 = verf.f32.pop %v1963
        %v1966 = vadd.f32 %v1964, 1.0
        %v1967 = vadd.f32 %v1965, 1.0
        %v1968 = vmul.f32 %v1960, %v1966
        %v1969 = vmul.f32 %v1961, %v1967
        %v1970 = vpack.c.bf16 %v1969, %v1968
        %v1987 = vunpack.c.l.b16 %v693
        %v1988 = vunpack.c.l.b16 %v694
        %v1989 = vunpack.c.l.b16 %v695
        %v1990 = vunpack.c.l.b16 %v696
        %v1991 = vunpack.c.l.b16 %v697
        %v1992 = vunpack.c.l.b16 %v698
        %v1993 = vunpack.c.l.b16 %v699
        %v1994 = vunpack.c.l.b16 %v700
        %v1995 = vunpack.c.l.b16 %v701
        %v1996 = vunpack.c.l.b16 %v702
        %v1997 = vunpack.c.l.b16 %v703
        %v1998 = vunpack.c.l.b16 %v704
        %v1999 = vunpack.c.l.b16 %v705
        %v2000 = vunpack.c.l.b16 %v706
        %v2001 = vunpack.c.l.b16 %v707
        %v2002 = vunpack.c.l.b16 %v708
        %v2003 = vpack.c.b16 %v1988, %v1987
        %v2004 = vpack.c.b16 %v1990, %v1989
        %v2005 = vpack.c.b16 %v1992, %v1991
        %v2006 = vpack.c.b16 %v1994, %v1993
        %v2007 = vpack.c.b16 %v1996, %v1995
        %v2008 = vpack.c.b16 %v1998, %v1997
        %v2009 = vpack.c.b16 %v2000, %v1999
        %v2010 = vpack.c.b16 %v2002, %v2001
        %2019 = vmatprep.subr.bf16.mxu0 0
        %2020 = vmatpush1.bf16.msra.mxu0 %v2010
        %2021 = vmatprep.subr.bf16.mxu0 0
        %2022 = vmatpush1.bf16.msra.mxu0 %v2009
        %2023 = vmatprep.subr.bf16.mxu0 0
        %2024 = vmatpush1.bf16.msra.mxu0 %v2008
        %2025 = vmatprep.subr.bf16.mxu0 0
        %2026 = vmatpush1.bf16.msra.mxu0 %v2007
        %2027 = vmatprep.subr.bf16.mxu0 0
        %2028 = vmatpush1.bf16.msra.mxu0 %v2006
        %2029 = vmatprep.subr.bf16.mxu0 0
        %2030 = vmatpush1.bf16.msra.mxu0 %v2005
        %2031 = vmatprep.subr.bf16.mxu0 0
        %2032 = vmatpush1.bf16.msra.mxu0 %v2004
        %2033 = vmatprep.subr.bf16.mxu0 0
        %2034 = vmatpush1.bf16.msra.mxu0 %v2003
        %2035 = vmatprep.subr.bf16.mxu0 0
        %2036 = vmatpush2.bf16.msra.mxu0 0
        %2037 = vmatprep.subr.bf16.mxu0 0
        %2038 = vmatpush2.bf16.msra.mxu0 0
        %2039 = vmatprep.subr.bf16.mxu0 0
        %2040 = vmatpush2.bf16.msra.mxu0 0
        %2041 = vmatprep.subr.bf16.mxu0 0
        %2042 = vmatpush2.bf16.msra.mxu0 0
        %2043 = vmatprep.subr.bf16.mxu0 0
        %2044 = vmatpush2.bf16.msra.mxu0 0
        %2045 = vmatprep.subr.bf16.mxu0 0
        %2046 = vmatpush2.bf16.msra.mxu0 0
        %2047 = vmatprep.subr.bf16.mxu0 0
        %2048 = vmatpush2.bf16.msra.mxu0 0
        %2049 = vmatprep.subr.bf16.mxu0 0
        %2050 = vmatpush2.bf16.msra.mxu0 0
        %2051 = vmatprep.mubr.bf16.mxu0 0
        %2052 = vmatmul.mubr.bf16.gmra.mxu0 %v1970
        %v2053 = vpop.f32.mrf.mxu0
        %v2054 = vadd.f32 0.0, %v2053
        %v2055 = vpop.f32.mrf.mxu0
        %v2056 = vpop.f32.mrf.mxu0
        %v2057 = vadd.f32 0.0, %v2056
        %v2058 = vpop.f32.mrf.mxu0
        %2059 = vdwg.mxu0
        %v2060 = vadd.f32 %v1853, %v2054
        %v2061 = vadd.f32 %v1854, %v2057
        %v2063 = vlaneseq
        %v2064 = vshrl.u32 %v2063, 7
        %v2065 = vsub.s32 0, %v2064
        %v2066 = vrot.slane %v709, %v2065
        %v2068 = vadd.f32 %v2060, %v2066
        %v2069 = vadd.f32 %v2061, %v2066
        %p2070 = scmp.lt.s32.totalorder %s28, 1
        // Predicated region
        $region89: #{tpu_custom_call.1} parent=79 // pred_check
          %p2071 = pneg %p2070
        $region90: #{tpu_custom_call.1} parent=79 // pred_check_branch
          %2073 = sbr.rel (%p2071) target = $region92
        $region91: #{tpu_custom_call.1} parent=79 // pred_region
          %2074 = vst.msk [vmem:[#allocation6] sm:$0xff] %vm723, %v2068
          %2075 = vst.msk [vmem:[#allocation6 + $0x8] sm:$0xff] %vm723, %v2069
        $region92: #{tpu_custom_call.1} parent=79 // pred_fallthru
          _
        %p2076 = scmp.eq.s32.totalorder %s28, 1
        // Predicated region
        $region93: #{tpu_custom_call.1} parent=79 // pred_check
          %p2077 = pneg %p2076
        $region94: #{tpu_custom_call.1} parent=79 // pred_check_branch
          %2079 = sbr.rel (%p2077) target = $region96
        $region95: #{tpu_custom_call.1} parent=79 // pred_region
          %v2080 = vsel %vm723, %v2068, 0.0
          %2081 = vadd.xlane.f32.xlu0 %v2080
          %v2082 = vpop.xlane.xlu0 %2081
          %v2083 = vsel %vm723, %v2069, 0.0
          %2084 = vadd.xlane.f32.xlu0 %v2083
          %v2085 = vpop.xlane.xlu0 %2084
          %v2086 = vmul.f32 %v2082, %v730
          %v2087 = vmul.f32 %v2085, %v730
          %v2088 = vsub.f32 %v2068, %v2086
          %v2089 = vsub.f32 %v2069, %v2087
          %v2090 = vmul.f32 %v2088, %v2088
          %v2091 = vmul.f32 %v2089, %v2089
          %v2092 = vsel %vm723, %v2090, 0.0
          %2093 = vadd.xlane.f32.xlu0 %v2092
          %v2094 = vpop.xlane.xlu0 %2093
          %v2095 = vsel %vm723, %v2091, 0.0
          %2096 = vadd.xlane.f32.xlu0 %v2095
          %v2097 = vpop.xlane.xlu0 %2096
          %v2098 = vmul.f32 %v2094, %v730
          %v2099 = vmul.f32 %v2097, %v730
          %v2100 = vadd.f32 %v2098, 1e-05
          %v2101 = vadd.f32 %v2099, 1e-05
          %v2102 = vrsqrt.pop %v2100
          %v2103 = vrsqrt.pop %v2101
          %v2104 = vmul.f32 %v2088, %v2102
          %v2105 = vmul.f32 %v2089, %v2103
          %v2107 = vlaneseq
          %v2108 = vshrl.u32 %v2107, 7
          %v2109 = vsub.s32 0, %v2108
          %v2110 = vrot.slane %v714, %v2109
          %v2112 = vmul.f32 %v2104, %v2110
          %v2113 = vmul.f32 %v2105, %v2110
          %v2115 = vlaneseq
          %v2116 = vshrl.u32 %v2115, 7
          %v2117 = vsub.s32 0, %v2116
          %v2118 = vrot.slane %v715, %v2117
          %v2120 = vadd.f32 %v2112, %v2118
          %v2121 = vadd.f32 %v2113, %v2118
          %2122 = vst.msk [vmem:[#allocation6] sm:$0xff] %vm723, %v2120
          %2123 = vst.msk [vmem:[#allocation6 + $0x8] sm:$0xff] %vm723, %v2121
        $region96: #{tpu_custom_call.1} parent=79 // pred_fallthru
          _
        // Predicated region
        $region97: #{tpu_custom_call.1} parent=79 // pred_check
          %p2124 = pneg %p416
        $region98: #{tpu_custom_call.1} parent=79 // pred_check_branch
          %2126 = sbr.rel (%p2124) target = $region100
        $region99: #{tpu_custom_call.1} parent=79 // pred_region
          %s2128 = ssub.s32 256, 256
          %2129 = vsyncadd [#allocation5], %s2128
          %s2130 = sshll.u32 [#allocation6], 4
          %s2131 = int_to_ptr.vmem [resolvable:$true] %s2130
          %2136 = dma.vmem_to_hbm [thread:$0]  %s2131, 256, %s15, [#allocation5], 128, 128, 8
        $region100: #{tpu_custom_call.1} parent=79 // pred_fallthru
          _
        // Predicated region
        $region101: #{tpu_custom_call.1} parent=79 // pred_check
          %p2137 = pneg %p416
        $region102: #{tpu_custom_call.1} parent=79 // pred_check_branch
          %2139 = sbr.rel (%p2137) target = $region104
        $region103: #{tpu_custom_call.1} parent=79 // pred_region
          %2140 = dma.done [#allocation5], 256
        $region104: #{tpu_custom_call.1} parent=79 // pred_fallthru
          _
      $region80: #{tpu_custom_call.1} parent=5 // pred_fallthru
        _
      %p2141 = scmp.le.s32.totalorder 2, %s23
      // Predicated region
      $region105: #{tpu_custom_call.1} parent=5 // pred_check
        %p2142 = pneg %p2141
      $region106: #{tpu_custom_call.1} parent=5 // pred_check_branch
        %2144 = sbr.rel (%p2142) target = $region108
      $region107: #{tpu_custom_call.1} parent=5 // pred_region
        %s2145 = ssub.s32 %s23, 2
      $region108: #{tpu_custom_call.1} parent=5 // pred_fallthru
        _
    $region6: #{tpu_custom_call.1} parent=1 // loop_footer
      %s27 = sadd.s32 1, %s23
    $region7: #{tpu_custom_call.1} parent=1 // loop_footer_branch
      %22 = sbr.rel target = $region3
    $region8: #{tpu_custom_call.1} parent=1 // loop_exit
      _
    %2146 = vsyncpa [#allocation4], 1
    %s2147 = scalar_lea.sflag [#allocation4], 1
    %2148 = vsyncpa %s2147, 1
    %2149 = vsyncpa [#allocation5], 1
    %s2150 = scalar_lea.sflag [#allocation5], 1
    %2151 = vsyncpa %s2150, 1

</llo_original>
